<compile_context>
chip_gen: v6e
topology: v6e:2x2x1
jax: 0.10.0
libtpu: 0.0.40
codegen_flags: <defaults>
</compile_context>

<pallas_src>
import jax
import jax.numpy as jnp
from jax.experimental import pallas as pl
from jax.experimental.pallas import tpu as pltpu


# ---------------------------------------------------------------------------
# small helpers
# ---------------------------------------------------------------------------

def _round_up(x, m):
    return (x + m - 1) // m * m


def _pad_axis(a, target, axis):
    """Zero-pad `a` along `axis` up to `target` (no-op if already there)."""
    if a.shape[axis] == target:
        return a
    pads = [(0, 0)] * a.ndim
    pads[axis] = (0, target - a.shape[axis])
    return jnp.pad(a, pads)


# ---------------------------------------------------------------------------
# Pallas kernels
# ---------------------------------------------------------------------------

def _conv_block_kernel(p_ref, w_ref, b_ref, scale_ref, shift_ref, o_ref):
    """Fused Conv (im2col matmul) + 2x2 MaxPool + bias + ReLU + BN(eval) affine.

    p_ref:     (4, TM, F)  bf16   4 = pool-window members, F multiple of 128
    w_ref:     (F, 128)    bf16   zero-padded output channels
    b_ref, scale_ref, shift_ref: (1, 128) f32
    o_ref:     (TM, 128)   bf16
    """
    four, tm, f = p_ref.shape
    ocp = w_ref.shape[1]
    # One tall MXU matmul over all 4 pool members (free reshape: tm % 16 == 0).
    p = p_ref[...].reshape(four * tm, f)
    y = jnp.dot(p, w_ref[...], preferred_element_type=jnp.float32)
    y = y.reshape(four, tm, ocp)
    # 2x2 max-pool over the member axis, then bias + ReLU hoisted past the max.
    m = jnp.maximum(jnp.maximum(y[0], y[1]), jnp.maximum(y[2], y[3]))
    m = jnp.maximum(m + b_ref[...], 0.0)
    # BatchNorm2d (inference affine).
    o_ref[...] = (m * scale_ref[...] + shift_ref[...]).astype(o_ref.dtype)


def _mlp_kernel(x_ref, w1_ref, b1_ref, w2_ref, b2_ref, o_ref):
    """Linear(576->64, with BN1d folded in) + ReLU + Dropout(eval=id) + Linear(64->3).

    All feature axes zero-padded to 128-lane multiples (640 / 128 / 128).
    """
    h = jnp.dot(x_ref[...], w1_ref[...], preferred_element_type=jnp.float32)
    h = jnp.maximum(h + b1_ref[...], 0.0)          # BN1d folded into w1/b1; ReLU
    # Dropout(p=0.25): identity in eval mode.
    o_ref[...] = jnp.dot(h.astype(w2_ref.dtype), w2_ref[...],
                         preferred_element_type=jnp.float32) + b2_ref[...]


# ---------------------------------------------------------------------------
# pallas_call wrappers (tiled, pipelined, megacore-parallel grid over rows)
# ---------------------------------------------------------------------------

def conv_block(p, w, b, scale, shift):
    """p: (4, M, F) bf16, F multiple of 128.  Returns (M, 128) bf16."""
    _, M, F = p.shape
    OCP = w.shape[1]                                  # 128 (lane-dense output)
    TM = min(512, _round_up(M, 16))                   # <=512 rows: fits v5e scoped VMEM
    Mp = _round_up(M, TM)
    p = _pad_axis(p, Mp, 1)
    grid = (Mp // TM,)

    flops = 2 * 4 * Mp * F * OCP
    bytes_accessed = (4 * Mp * F + F * OCP + Mp * OCP) * 2 + 3 * OCP * 4

    out = pl.pallas_call(
        _conv_block_kernel,
        grid=grid,
        out_shape=jax.ShapeDtypeStruct((Mp, OCP), jnp.bfloat16),
        in_specs=[
            pl.BlockSpec((4, TM, F), lambda i: (0, i, 0)),   # patch tile (pipelined)
            pl.BlockSpec((F, OCP), lambda i: (0, 0)),        # weights: VMEM-resident
            pl.BlockSpec((1, OCP), lambda i: (0, 0)),
            pl.BlockSpec((1, OCP), lambda i: (0, 0)),
            pl.BlockSpec((1, OCP), lambda i: (0, 0)),
        ],
        out_specs=pl.BlockSpec((TM, OCP), lambda i: (i, 0)),
        compiler_params=pltpu.CompilerParams(
            dimension_semantics=("parallel",),
            vmem_limit_bytes=32 * 1024 * 1024),
        cost_estimate=pl.CostEstimate(flops=flops, transcendentals=0,
                                      bytes_accessed=bytes_accessed),
    )(p, w, b, scale, shift)
    return out[:M]


def mlp_head(x, w1, b1, w2, b2):
    """x: (N, 640) bf16.  Returns (N, 128) f32 (cols >= 3 are zero padding)."""
    N, F1 = x.shape
    H = w1.shape[1]                                   # 128
    O = w2.shape[1]                                   # 128
    TB = min(256, _round_up(N, 16))
    Np = _round_up(N, TB)
    x = _pad_axis(x, Np, 0)
    grid = (Np // TB,)

    flops = 2 * Np * (F1 * H + H * O)
    bytes_accessed = (Np * F1 + F1 * H + H * O) * 2 + Np * O * 4 + 2 * H * 4

    out = pl.pallas_call(
        _mlp_kernel,
        grid=grid,
        out_shape=jax.ShapeDtypeStruct((Np, O), jnp.float32),
        in_specs=[
            pl.BlockSpec((TB, F1), lambda i: (i, 0)),
            pl.BlockSpec((F1, H), lambda i: (0, 0)),
            pl.BlockSpec((1, H), lambda i: (0, 0)),
            pl.BlockSpec((H, O), lambda i: (0, 0)),
            pl.BlockSpec((1, O), lambda i: (0, 0)),
        ],
        out_specs=pl.BlockSpec((TB, O), lambda i: (i, 0)),
        compiler_params=pltpu.CompilerParams(
            dimension_semantics=("parallel",),
            vmem_limit_bytes=32 * 1024 * 1024),
        cost_estimate=pl.CostEstimate(flops=flops, transcendentals=0,
                                      bytes_accessed=bytes_accessed),
    )(x, w1, b1, w2, b2)
    return out[:N]


# ---------------------------------------------------------------------------
# JAX glue: im2col with pool-window arrangement (setup/reshape only)
# ---------------------------------------------------------------------------

def _im2col_pooled(x, k=3, stride=2, pad=3):
    """x: NHWC.  Returns (4, N*PH*PW, k*k*C): conv-output positions grouped by 2x2
    max-pool window, with the 4 members on the leading axis."""
    N, H, W, C = x.shape
    xp = jnp.pad(x, ((0, 0), (pad, pad), (pad, pad), (0, 0)))
    OH = (H + 2 * pad - k) // stride + 1
    OW = (W + 2 * pad - k) // stride + 1
    cols = []
    for dh in range(k):
        for dw in range(k):
            cols.append(xp[:, dh:dh + stride * (OH - 1) + 1:stride,
                           dw:dw + stride * (OW - 1) + 1:stride, :])
    # feature index = (kh*k + kw)*C + ic  -> matches weight layout (KH,KW,IC,OC)
    patches = jnp.concatenate(cols, axis=-1)          # (N, OH, OW, k*k*C)
    PH, PW = OH // 2, OW // 2                         # MaxPool2d(2), floor
    patches = patches[:, :2 * PH, :2 * PW, :]
    F = k * k * C
    p = patches.reshape(N, PH, 2, PW, 2, F)
    p = jnp.transpose(p, (2, 4, 0, 1, 3, 5)).reshape(4, N * PH * PW, F)
    return p, PH, PW


def _conv_w_to_mat(w):
    """(OC, IC, KH, KW) torch layout -> (KH*KW*IC, OC) matmul layout."""
    oc, ic, kh, kw = w.shape
    return jnp.transpose(w, (2, 3, 1, 0)).reshape(kh * kw * ic, oc)


def _bn_affine(p, eps=1e-5):
    scale = p['gamma'] / jnp.sqrt(p['var'] + eps)
    shift = p['beta'] - p['mean'] * scale
    return scale, shift


# ---------------------------------------------------------------------------
# Parameter construction (deterministic, synthetic) and packing for the kernels
# ---------------------------------------------------------------------------

def make_params(key):
    """Raw parameters in PyTorch layouts (used by the pure-JAX reference)."""
    keys = jax.random.split(key, 12)
    f32 = jnp.float32

    def rnd(k, shape, s=0.1):
        return (s * jax.random.normal(k, shape)).astype(f32)

    def bn(k, c):
        k1, k2, k3, k4 = jax.random.split(k, 4)
        return dict(gamma=1.0 + rnd(k1, (c,), 0.05), beta=rnd(k2, (c,), 0.05),
                    mean=rnd(k3, (c,), 0.05), var=1.0 + jnp.abs(rnd(k4, (c,), 0.05)))

    return dict(
        conv1_w=rnd(keys[0], (32, 2, 3, 3)),  conv1_b=rnd(keys[1], (32,)),
        conv2_w=rnd(keys[2], (64, 2, 3, 3)),  conv2_b=rnd(keys[3], (64,)),   # groups=16
        bn1=bn(keys[4], 32), bn2=bn(keys[5], 64), bn3=bn(keys[6], 64),
        fc1_w=rnd(keys[7], (64, 576), 0.05),  fc1_b=rnd(keys[8], (64,)),
        fc2_w=rnd(keys[9], (3, 64), 0.05),    fc2_b=rnd(keys[10], (3,)),
    )


def pack_params(raw):
    """Fold / pad / cast raw params into the kernel-friendly layouts."""
    OCP = 128

    def pad_mat(m, rows, cols):
        return _pad_axis(_pad_axis(m, rows, 0), cols, 1).astype(jnp.bfloat16)

    def pad_vec(v, cols=OCP):
        return _pad_axis(v[None, :], cols, 1).astype(jnp.float32)

    # conv1: (18,32) -> (128,128)
    w1m = pad_mat(_conv_w_to_mat(raw['conv1_w']), 128, OCP)
    s1, t1 = _bn_affine(raw['bn1'])

    # conv2 (groups=16): exact block-diagonal dense expansion -> (288,64) -> (384,128)
    w2_dense = jnp.zeros((64, 32, 3, 3), jnp.float32)
    for oc in range(64):
        g = oc // 4                      # 64 out-ch / 16 groups = 4 per group, IC=2 each
        w2_dense = w2_dense.at[oc, 2 * g:2 * g + 2].set(raw['conv2_w'][oc])
    w2m = pad_mat(_conv_w_to_mat(w2_dense), 384, OCP)
    s2, t2 = _bn_affine(raw['bn2'])

    # fc1: torch flatten index is c*9 + s (NCHW); ours is s*64 + c (NHWC) -> permute cols.
    fc1 = raw['fc1_w'].reshape(64, 64, 9).transpose(0, 2, 1).reshape(64, 576)
    s3, t3 = _bn_affine(raw['bn3'])
    fc1 = fc1 * s3[:, None]                           # fold BatchNorm1d into fc1
    fc1_b = raw['fc1_b'] * s3 + t3
    fc1m = pad_mat(jnp.transpose(fc1), 640, OCP)      # (576,64) -> (640,128)
    fc2m = pad_mat(jnp.transpose(raw['fc2_w']), OCP, OCP)   # (64,3) -> (128,128)

    return dict(
        w1m=w1m, b1=pad_vec(raw['conv1_b']), bn1_scale=pad_vec(s1), bn1_shift=pad_vec(t1),
        w2m=w2m, b2=pad_vec(raw['conv2_b']), bn2_scale=pad_vec(s2), bn2_shift=pad_vec(t2),
        fc1=fc1m, fc1_b=pad_vec(fc1_b),
        fc2=fc2m, fc2_b=pad_vec(raw['fc2_b']),
    )


# ---------------------------------------------------------------------------
# Forward pass (Pallas path)
# ---------------------------------------------------------------------------

def eegcnn_forward(x_nchw, params):
    N = x_nchw.shape[0]
    x = jnp.transpose(x_nchw, (0, 2, 3, 1)).astype(jnp.bfloat16)      # NHWC, bf16 path

    # conv block 1: (N,24,24,2) -> (N,7,7,32)
    p1, ph1, pw1 = _im2col_pooled(x, k=3, stride=2, pad=3)            # (4, N*49, 18)
    p1 = _pad_axis(p1, 128, 2)                                        # lane-dense features
    y1 = conv_block(p1, params['w1m'], params['b1'],
                    params['bn1_scale'], params['bn1_shift'])         # (N*49, 128) bf16
    y1 = y1[:, :32].reshape(N, ph1, pw1, 32)

    # conv block 2 (groups=16 via block-diag dense weight): -> (N,3,3,64)
    p2, ph2, pw2 = _im2col_pooled(y1, k=3, stride=2, pad=3)           # (4, N*9, 288)
    p2 = _pad_axis(p2, 384, 2)
    y2 = conv_block(p2, params['w2m'], params['b2'],
                    params['bn2_scale'], params['bn2_shift'])         # (N*9, 128) bf16

    # flatten in NHWC order; fc1 weight columns were permuted (and BN1d folded) to match
    feat = y2[:, :64].reshape(N, ph2 * pw2 * 64)                      # (N, 576)
    feat = _pad_axis(feat, 640, 1)

    out = mlp_head(feat, params['fc1'], params['fc1_b'],
                   params['fc2'], params['fc2_b'])                    # (N, 128) f32
    return out[:, :3]


# ---------------------------------------------------------------------------
# Pure-JAX reference (f32, mirrors the PyTorch module exactly)
# ---------------------------------------------------------------------------

def reference_forward(x_nchw, raw, eps=1e-5):
    def bn2d(y, p):
        s = p['gamma'] / jnp.sqrt(p['var'] + eps)
        return y * s[None, :, None, None] + (p['beta'] - p['mean'] * s)[None, :, None, None]

    def block(x, w, b, bnp, groups):
        y = jax.lax.conv_general_dilated(
            x, w, window_strides=(2, 2), padding=[(3, 3), (3, 3)],
            dimension_numbers=('NCHW', 'OIHW', 'NCHW'),
            feature_group_count=groups) + b[None, :, None, None]
        y = jnp.maximum(y, 0.0)
        n, c, h, w_ = y.shape
        y = y[:, :, :h // 2 * 2, :w_ // 2 * 2].reshape(n, c, h // 2, 2, w_ // 2, 2)
        y = y.max(axis=(3, 5))
        return bn2d(y, bnp)

    y1 = block(x_nchw, raw['conv1_w'], raw['conv1_b'], raw['bn1'], 1)
    y2 = block(y1, raw['conv2_w'], raw['conv2_b'], raw['bn2'], 16)
    f = y2.reshape(y2.shape[0], -1)                                   # NCHW flatten
    h = f @ raw['fc1_w'].T + raw['fc1_b']
    s3 = raw['bn3']['gamma'] / jnp.sqrt(raw['bn3']['var'] + eps)
    h = h * s3 + (raw['bn3']['beta'] - raw['bn3']['mean'] * s3)
    h = jnp.maximum(h, 0.0)                                           # Dropout eval = id
    return h @ raw['fc2_w'].T + raw['fc2_b']


# ---------------------------------------------------------------------------

if __name__ == "__main__":
    # Input spatial size must be 24x24 so that conv2 output is 3x3 (-> 64*3*3 = 576 feats).
    N = 4
    x = jax.random.normal(jax.random.PRNGKey(0), (N, 2, 24, 24), dtype=jnp.float32)
    raw = make_params(jax.random.PRNGKey(1))
    params = pack_params(raw)

    fwd = jax.jit(eegcnn_forward)
    out = jax.block_until_ready(fwd(x, params))

    assert out.shape == (N, 3), out.shape
    assert bool(jnp.all(jnp.isfinite(out)))

    # Compare against the f32 pure-JAX reference (bf16 data path -> loose tolerance).
    ref = reference_forward(x, raw)
    err = float(jnp.max(jnp.abs(out - ref)))
    assert err < 1e-1, f"max abs err vs reference: {err}"

    print("KERNEL_OK")
</pallas_src>

<mosaic_0001>
module attributes {stable_mosaic.version = 11 : i64} {
  func.func @_conv_block_kernel(%arg0: i32, %arg1: memref<4x208x128xbf16, #tpu.memory_space<vmem>>, %arg2: memref<128x128xbf16, #tpu.memory_space<vmem>>, %arg3: memref<1x128xf32, #tpu.memory_space<vmem>>, %arg4: memref<1x128xf32, #tpu.memory_space<vmem>>, %arg5: memref<1x128xf32, #tpu.memory_space<vmem>>, %arg6: memref<208x128xbf16, #tpu.memory_space<vmem>>) attributes {dimension_semantics = [#tpu.dimension_semantics<parallel>], iteration_bounds = array<i64: 1>, scalar_prefetch = 0 : i64, scratch_operands = 0 : i64, tpu.core_type = #tpu.core_type<tc>, window_params = [{transform_indices = @transform_0, window_bounds = array<i64: 4, 208, 128>}, {pipeline_mode = #tpu.pipeline_mode<synchronous>, transform_indices = @transform_1, window_bounds = array<i64: 128, 128>}, {pipeline_mode = #tpu.pipeline_mode<synchronous>, transform_indices = @transform_2, window_bounds = array<i64: 1, 128>}, {pipeline_mode = #tpu.pipeline_mode<synchronous>, transform_indices = @transform_3, window_bounds = array<i64: 1, 128>}, {pipeline_mode = #tpu.pipeline_mode<synchronous>, transform_indices = @transform_4, window_bounds = array<i64: 1, 128>}, {transform_indices = @transform_5, window_bounds = array<i64: 208, 128>}]} {
    %c0 = arith.constant 0 : index
    %c0_0 = arith.constant 0 : index
    %c0_1 = arith.constant 0 : index
    %0 = vector.load %arg1[%c0, %c0_0, %c0_1] : memref<4x208x128xbf16, #tpu.memory_space<vmem>>, vector<4x208x128xbf16>
    %1 = vector.shape_cast %0 : vector<4x208x128xbf16> to vector<832x128xbf16>
    %c0_2 = arith.constant 0 : index
    %c0_3 = arith.constant 0 : index
    %2 = vector.load %arg2[%c0_2, %c0_3] : memref<128x128xbf16, #tpu.memory_space<vmem>>, vector<128x128xbf16>
    %cst = arith.constant dense<0.000000e+00> : vector<832x128xf32>
    %3 = tpu.matmul %1, %2, %cst {dimension_numbers = #tpu.dot_dimension_numbers<[1], [0], [0], [1], [0, 0, 1, 1], [], []>} : vector<832x128xbf16>, vector<128x128xbf16>, vector<832x128xf32> -> vector<832x128xf32>
    %4 = vector.shape_cast %3 : vector<832x128xf32> to vector<4x208x128xf32>
    %5 = vector.extract_strided_slice %4 {offsets = [0, 0, 0], sizes = [1, 208, 128], strides = [1, 1, 1]} : vector<4x208x128xf32> to vector<1x208x128xf32>
    %6 = vector.shape_cast %5 : vector<1x208x128xf32> to vector<208x128xf32>
    %7 = vector.extract_strided_slice %4 {offsets = [1, 0, 0], sizes = [1, 208, 128], strides = [1, 1, 1]} : vector<4x208x128xf32> to vector<1x208x128xf32>
    %8 = vector.shape_cast %7 : vector<1x208x128xf32> to vector<208x128xf32>
    %9 = arith.maximumf %6, %8 : vector<208x128xf32>
    %10 = vector.extract_strided_slice %4 {offsets = [2, 0, 0], sizes = [1, 208, 128], strides = [1, 1, 1]} : vector<4x208x128xf32> to vector<1x208x128xf32>
    %11 = vector.shape_cast %10 : vector<1x208x128xf32> to vector<208x128xf32>
    %12 = vector.extract_strided_slice %4 {offsets = [3, 0, 0], sizes = [1, 208, 128], strides = [1, 1, 1]} : vector<4x208x128xf32> to vector<1x208x128xf32>
    %13 = vector.shape_cast %12 : vector<1x208x128xf32> to vector<208x128xf32>
    %14 = arith.maximumf %11, %13 : vector<208x128xf32>
    %15 = arith.maximumf %9, %14 : vector<208x128xf32>
    %c0_4 = arith.constant 0 : index
    %c0_5 = arith.constant 0 : index
    %16 = vector.load %arg3[%c0_4, %c0_5] : memref<1x128xf32, #tpu.memory_space<vmem>>, vector<1x128xf32>
    %17 = vector.broadcast %16 : vector<1x128xf32> to vector<208x128xf32>
    %18 = arith.addf %15, %17 : vector<208x128xf32>
    %cst_6 = arith.constant 0.000000e+00 : f32
    %19 = vector.broadcast %cst_6 : f32 to vector<208x128xf32>
    %20 = arith.maximumf %18, %19 : vector<208x128xf32>
    %c0_7 = arith.constant 0 : index
    %c0_8 = arith.constant 0 : index
    %21 = vector.load %arg4[%c0_7, %c0_8] : memref<1x128xf32, #tpu.memory_space<vmem>>, vector<1x128xf32>
    %22 = vector.broadcast %21 : vector<1x128xf32> to vector<208x128xf32>
    %23 = arith.mulf %20, %22 : vector<208x128xf32>
    %c0_9 = arith.constant 0 : index
    %c0_10 = arith.constant 0 : index
    %24 = vector.load %arg5[%c0_9, %c0_10] : memref<1x128xf32, #tpu.memory_space<vmem>>, vector<1x128xf32>
    %25 = vector.broadcast %24 : vector<1x128xf32> to vector<208x128xf32>
    %26 = arith.addf %23, %25 : vector<208x128xf32>
    %27 = arith.truncf %26 : vector<208x128xf32> to vector<208x128xbf16>
    %c0_11 = arith.constant 0 : index
    %c0_12 = arith.constant 0 : index
    %28 = vector.load %arg6[%c0_11, %c0_12] : memref<208x128xbf16, #tpu.memory_space<vmem>>, vector<208x128xbf16>
    tpu.vector_store %arg6[%c0_11, %c0_12], %27 {strides = array<i32>} : memref<208x128xbf16, #tpu.memory_space<vmem>>, vector<208x128xbf16>,
    return
  }
  func.func @transform_0(%arg0: i32) -> (i32, i32, i32) {
    %c0_i32 = arith.constant 0 : i32
    %c0_i32_0 = arith.constant 0 : i32
    %c0_i32_1 = arith.constant 0 : i32
    return %c0_i32, %arg0, %c0_i32_0 : i32, i32, i32
  }
  func.func @transform_1(%arg0: i32) -> (i32, i32) {
    %c0_i32 = arith.constant 0 : i32
    %c0_i32_0 = arith.constant 0 : i32
    %c0_i32_1 = arith.constant 0 : i32
    return %c0_i32, %c0_i32_0 : i32, i32
  }
  func.func @transform_2(%arg0: i32) -> (i32, i32) {
    %c0_i32 = arith.constant 0 : i32
    %c0_i32_0 = arith.constant 0 : i32
    %c0_i32_1 = arith.constant 0 : i32
    return %c0_i32, %c0_i32_0 : i32, i32
  }
  func.func @transform_3(%arg0: i32) -> (i32, i32) {
    %c0_i32 = arith.constant 0 : i32
    %c0_i32_0 = arith.constant 0 : i32
    %c0_i32_1 = arith.constant 0 : i32
    return %c0_i32, %c0_i32_0 : i32, i32
  }
  func.func @transform_4(%arg0: i32) -> (i32, i32) {
    %c0_i32 = arith.constant 0 : i32
    %c0_i32_0 = arith.constant 0 : i32
    %c0_i32_1 = arith.constant 0 : i32
    return %c0_i32, %c0_i32_0 : i32, i32
  }
  func.func @transform_5(%arg0: i32) -> (i32, i32) {
    %c0_i32 = arith.constant 0 : i32
    %c0_i32_0 = arith.constant 0 : i32
    return %arg0, %c0_i32 : i32, i32
  }
}

module attributes {stable_mosaic.version = 11 : i64} {
  func.func @_conv_block_kernel(%arg0: i32, %arg1: memref<4x48x384xbf16, #tpu.memory_space<vmem>>, %arg2: memref<384x128xbf16, #tpu.memory_space<vmem>>, %arg3: memref<1x128xf32, #tpu.memory_space<vmem>>, %arg4: memref<1x128xf32, #tpu.memory_space<vmem>>, %arg5: memref<1x128xf32, #tpu.memory_space<vmem>>, %arg6: memref<48x128xbf16, #tpu.memory_space<vmem>>) attributes {dimension_semantics = [#tpu.dimension_semantics<parallel>], iteration_bounds = array<i64: 1>, scalar_prefetch = 0 : i64, scratch_operands = 0 : i64, tpu.core_type = #tpu.core_type<tc>, window_params = [{transform_indices = @transform_0, window_bounds = array<i64: 4, 48, 384>}, {pipeline_mode = #tpu.pipeline_mode<synchronous>, transform_indices = @transform_1, window_bounds = array<i64: 384, 128>}, {pipeline_mode = #tpu.pipeline_mode<synchronous>, transform_indices = @transform_2, window_bounds = array<i64: 1, 128>}, {pipeline_mode = #tpu.pipeline_mode<synchronous>, transform_indices = @transform_3, window_bounds = array<i64: 1, 128>}, {pipeline_mode = #tpu.pipeline_mode<synchronous>, transform_indices = @transform_4, window_bounds = array<i64: 1, 128>}, {transform_indices = @transform_5, window_bounds = array<i64: 48, 128>}]} {
    %c0 = arith.constant 0 : index
    %c0_0 = arith.constant 0 : index
    %c0_1 = arith.constant 0 : index
    %0 = vector.load %arg1[%c0, %c0_0, %c0_1] : memref<4x48x384xbf16, #tpu.memory_space<vmem>>, vector<4x48x384xbf16>
    %1 = vector.shape_cast %0 : vector<4x48x384xbf16> to vector<192x384xbf16>
    %c0_2 = arith.constant 0 : index
    %c0_3 = arith.constant 0 : index
    %2 = vector.load %arg2[%c0_2, %c0_3] : memref<384x128xbf16, #tpu.memory_space<vmem>>, vector<384x128xbf16>
    %cst = arith.constant dense<0.000000e+00> : vector<192x128xf32>
    %3 = tpu.matmul %1, %2, %cst {dimension_numbers = #tpu.dot_dimension_numbers<[1], [0], [0], [1], [0, 0, 1, 1], [], []>} : vector<192x384xbf16>, vector<384x128xbf16>, vector<192x128xf32> -> vector<192x128xf32>
    %4 = vector.shape_cast %3 : vector<192x128xf32> to vector<4x48x128xf32>
    %5 = vector.extract_strided_slice %4 {offsets = [0, 0, 0], sizes = [1, 48, 128], strides = [1, 1, 1]} : vector<4x48x128xf32> to vector<1x48x128xf32>
    %6 = vector.shape_cast %5 : vector<1x48x128xf32> to vector<48x128xf32>
    %7 = vector.extract_strided_slice %4 {offsets = [1, 0, 0], sizes = [1, 48, 128], strides = [1, 1, 1]} : vector<4x48x128xf32> to vector<1x48x128xf32>
    %8 = vector.shape_cast %7 : vector<1x48x128xf32> to vector<48x128xf32>
    %9 = arith.maximumf %6, %8 : vector<48x128xf32>
    %10 = vector.extract_strided_slice %4 {offsets = [2, 0, 0], sizes = [1, 48, 128], strides = [1, 1, 1]} : vector<4x48x128xf32> to vector<1x48x128xf32>
    %11 = vector.shape_cast %10 : vector<1x48x128xf32> to vector<48x128xf32>
    %12 = vector.extract_strided_slice %4 {offsets = [3, 0, 0], sizes = [1, 48, 128], strides = [1, 1, 1]} : vector<4x48x128xf32> to vector<1x48x128xf32>
    %13 = vector.shape_cast %12 : vector<1x48x128xf32> to vector<48x128xf32>
    %14 = arith.maximumf %11, %13 : vector<48x128xf32>
    %15 = arith.maximumf %9, %14 : vector<48x128xf32>
    %c0_4 = arith.constant 0 : index
    %c0_5 = arith.constant 0 : index
    %16 = vector.load %arg3[%c0_4, %c0_5] : memref<1x128xf32, #tpu.memory_space<vmem>>, vector<1x128xf32>
    %17 = vector.broadcast %16 : vector<1x128xf32> to vector<48x128xf32>
    %18 = arith.addf %15, %17 : vector<48x128xf32>
    %cst_6 = arith.constant 0.000000e+00 : f32
    %19 = vector.broadcast %cst_6 : f32 to vector<48x128xf32>
    %20 = arith.maximumf %18, %19 : vector<48x128xf32>
    %c0_7 = arith.constant 0 : index
    %c0_8 = arith.constant 0 : index
    %21 = vector.load %arg4[%c0_7, %c0_8] : memref<1x128xf32, #tpu.memory_space<vmem>>, vector<1x128xf32>
    %22 = vector.broadcast %21 : vector<1x128xf32> to vector<48x128xf32>
    %23 = arith.mulf %20, %22 : vector<48x128xf32>
    %c0_9 = arith.constant 0 : index
    %c0_10 = arith.constant 0 : index
    %24 = vector.load %arg5[%c0_9, %c0_10] : memref<1x128xf32, #tpu.memory_space<vmem>>, vector<1x128xf32>
    %25 = vector.broadcast %24 : vector<1x128xf32> to vector<48x128xf32>
    %26 = arith.addf %23, %25 : vector<48x128xf32>
    %27 = arith.truncf %26 : vector<48x128xf32> to vector<48x128xbf16>
    %c0_11 = arith.constant 0 : index
    %c0_12 = arith.constant 0 : index
    %28 = vector.load %arg6[%c0_11, %c0_12] : memref<48x128xbf16, #tpu.memory_space<vmem>>, vector<48x128xbf16>
    tpu.vector_store %arg6[%c0_11, %c0_12], %27 {strides = array<i32>} : memref<48x128xbf16, #tpu.memory_space<vmem>>, vector<48x128xbf16>,
    return
  }
  func.func @transform_0(%arg0: i32) -> (i32, i32, i32) {
    %c0_i32 = arith.constant 0 : i32
    %c0_i32_0 = arith.constant 0 : i32
    %c0_i32_1 = arith.constant 0 : i32
    return %c0_i32, %arg0, %c0_i32_0 : i32, i32, i32
  }
  func.func @transform_1(%arg0: i32) -> (i32, i32) {
    %c0_i32 = arith.constant 0 : i32
    %c0_i32_0 = arith.constant 0 : i32
    %c0_i32_1 = arith.constant 0 : i32
    return %c0_i32, %c0_i32_0 : i32, i32
  }
  func.func @transform_2(%arg0: i32) -> (i32, i32) {
    %c0_i32 = arith.constant 0 : i32
    %c0_i32_0 = arith.constant 0 : i32
    %c0_i32_1 = arith.constant 0 : i32
    return %c0_i32, %c0_i32_0 : i32, i32
  }
  func.func @transform_3(%arg0: i32) -> (i32, i32) {
    %c0_i32 = arith.constant 0 : i32
    %c0_i32_0 = arith.constant 0 : i32
    %c0_i32_1 = arith.constant 0 : i32
    return %c0_i32, %c0_i32_0 : i32, i32
  }
  func.func @transform_4(%arg0: i32) -> (i32, i32) {
    %c0_i32 = arith.constant 0 : i32
    %c0_i32_0 = arith.constant 0 : i32
    %c0_i32_1 = arith.constant 0 : i32
    return %c0_i32, %c0_i32_0 : i32, i32
  }
  func.func @transform_5(%arg0: i32) -> (i32, i32) {
    %c0_i32 = arith.constant 0 : i32
    %c0_i32_0 = arith.constant 0 : i32
    return %arg0, %c0_i32 : i32, i32
  }
}

module attributes {stable_mosaic.version = 11 : i64} {
  func.func @_mlp_kernel(%arg0: i32, %arg1: memref<16x640xbf16, #tpu.memory_space<vmem>>, %arg2: memref<640x128xbf16, #tpu.memory_space<vmem>>, %arg3: memref<1x128xf32, #tpu.memory_space<vmem>>, %arg4: memref<128x128xbf16, #tpu.memory_space<vmem>>, %arg5: memref<1x128xf32, #tpu.memory_space<vmem>>, %arg6: memref<16x128xf32, #tpu.memory_space<vmem>>) attributes {dimension_semantics = [#tpu.dimension_semantics<parallel>], iteration_bounds = array<i64: 1>, scalar_prefetch = 0 : i64, scratch_operands = 0 : i64, tpu.core_type = #tpu.core_type<tc>, window_params = [{transform_indices = @transform_0, window_bounds = array<i64: 16, 640>}, {pipeline_mode = #tpu.pipeline_mode<synchronous>, transform_indices = @transform_1, window_bounds = array<i64: 640, 128>}, {pipeline_mode = #tpu.pipeline_mode<synchronous>, transform_indices = @transform_2, window_bounds = array<i64: 1, 128>}, {pipeline_mode = #tpu.pipeline_mode<synchronous>, transform_indices = @transform_3, window_bounds = array<i64: 128, 128>}, {pipeline_mode = #tpu.pipeline_mode<synchronous>, transform_indices = @transform_4, window_bounds = array<i64: 1, 128>}, {transform_indices = @transform_5, window_bounds = array<i64: 16, 128>}]} {
    %c0 = arith.constant 0 : index
    %c0_0 = arith.constant 0 : index
    %0 = vector.load %arg1[%c0, %c0_0] : memref<16x640xbf16, #tpu.memory_space<vmem>>, vector<16x640xbf16>
    %c0_1 = arith.constant 0 : index
    %c0_2 = arith.constant 0 : index
    %1 = vector.load %arg2[%c0_1, %c0_2] : memref<640x128xbf16, #tpu.memory_space<vmem>>, vector<640x128xbf16>
    %cst = arith.constant dense<0.000000e+00> : vector<16x128xf32>
    %2 = tpu.matmul %0, %1, %cst {dimension_numbers = #tpu.dot_dimension_numbers<[1], [0], [0], [1], [0, 0, 1, 1], [], []>} : vector<16x640xbf16>, vector<640x128xbf16>, vector<16x128xf32> -> vector<16x128xf32>
    %c0_3 = arith.constant 0 : index
    %c0_4 = arith.constant 0 : index
    %3 = vector.load %arg3[%c0_3, %c0_4] : memref<1x128xf32, #tpu.memory_space<vmem>>, vector<1x128xf32>
    %4 = vector.broadcast %3 : vector<1x128xf32> to vector<16x128xf32>
    %5 = arith.addf %2, %4 : vector<16x128xf32>
    %cst_5 = arith.constant 0.000000e+00 : f32
    %6 = vector.broadcast %cst_5 : f32 to vector<16x128xf32>
    %7 = arith.maximumf %5, %6 : vector<16x128xf32>
    %8 = arith.truncf %7 : vector<16x128xf32> to vector<16x128xbf16>
    %c0_6 = arith.constant 0 : index
    %c0_7 = arith.constant 0 : index
    %9 = vector.load %arg4[%c0_6, %c0_7] : memref<128x128xbf16, #tpu.memory_space<vmem>>, vector<128x128xbf16>
    %cst_8 = arith.constant dense<0.000000e+00> : vector<16x128xf32>
    %10 = tpu.matmul %8, %9, %cst_8 {dimension_numbers = #tpu.dot_dimension_numbers<[1], [0], [0], [1], [0, 0, 1, 1], [], []>} : vector<16x128xbf16>, vector<128x128xbf16>, vector<16x128xf32> -> vector<16x128xf32>
    %c0_9 = arith.constant 0 : index
    %c0_10 = arith.constant 0 : index
    %11 = vector.load %arg5[%c0_9, %c0_10] : memref<1x128xf32, #tpu.memory_space<vmem>>, vector<1x128xf32>
    %12 = vector.broadcast %11 : vector<1x128xf32> to vector<16x128xf32>
    %13 = arith.addf %10, %12 : vector<16x128xf32>
    %c0_11 = arith.constant 0 : index
    %c0_12 = arith.constant 0 : index
    %14 = vector.load %arg6[%c0_11, %c0_12] : memref<16x128xf32, #tpu.memory_space<vmem>>, vector<16x128xf32>
    tpu.vector_store %arg6[%c0_11, %c0_12], %13 {strides = array<i32>} : memref<16x128xf32, #tpu.memory_space<vmem>>, vector<16x128xf32>,
    return
  }
  func.func @transform_0(%arg0: i32) -> (i32, i32) {
    %c0_i32 = arith.constant 0 : i32
    %c0_i32_0 = arith.constant 0 : i32
    return %arg0, %c0_i32 : i32, i32
  }
  func.func @transform_1(%arg0: i32) -> (i32, i32) {
    %c0_i32 = arith.constant 0 : i32
    %c0_i32_0 = arith.constant 0 : i32
    %c0_i32_1 = arith.constant 0 : i32
    return %c0_i32, %c0_i32_0 : i32, i32
  }
  func.func @transform_2(%arg0: i32) -> (i32, i32) {
    %c0_i32 = arith.constant 0 : i32
    %c0_i32_0 = arith.constant 0 : i32
    %c0_i32_1 = arith.constant 0 : i32
    return %c0_i32, %c0_i32_0 : i32, i32
  }
  func.func @transform_3(%arg0: i32) -> (i32, i32) {
    %c0_i32 = arith.constant 0 : i32
    %c0_i32_0 = arith.constant 0 : i32
    %c0_i32_1 = arith.constant 0 : i32
    return %c0_i32, %c0_i32_0 : i32, i32
  }
  func.func @transform_4(%arg0: i32) -> (i32, i32) {
    %c0_i32 = arith.constant 0 : i32
    %c0_i32_0 = arith.constant 0 : i32
    %c0_i32_1 = arith.constant 0 : i32
    return %c0_i32, %c0_i32_0 : i32, i32
  }
  func.func @transform_5(%arg0: i32) -> (i32, i32) {
    %c0_i32 = arith.constant 0 : i32
    %c0_i32_0 = arith.constant 0 : i32
    return %arg0, %c0_i32 : i32, i32
  }
}

</mosaic_0001>

<llo_original>
// kernel: eegcnn_forward.3
$region0: #{eegcnn_forward.3}
  #allocation0 [shape = 'u32[]', space=smem, size = 0x4, offset = 0x4, fixed_abs, tag = 'smem constant byte address 0x4 - core index']
  #allocation1 [shape = 'u32[144,128]{1,0:T(1,128)}', space=vmem, size = 0x12000, scoped, tag = 'internal scratch']
  %s0 = inlined_call_operand.vmem [shape: bf16[4,208,128], index: 0, kind: input, shape index: {}]
  %s1 = inlined_call_operand.vmem [shape: bf16[128,128], index: 1, kind: input, shape index: {}]
  %s2 = inlined_call_operand.vmem [shape: f32[1,128], index: 2, kind: input, shape index: {}]
  %s3 = inlined_call_operand.vmem [shape: f32[1,128], index: 3, kind: input, shape index: {}]
  %s4 = inlined_call_operand.vmem [shape: f32[1,128], index: 4, kind: input, shape index: {}]
  %s5 = inlined_call_operand.vmem [shape: bf16[208,128], index: 5, kind: output, shape index: {}]
  %s6 = sld [smem:[#allocation0]]
  $region30: #{eegcnn_forward.3} parent=0
    _
  %s8 = ssub.s32 1, %s6
  %s9 = scalar_select 0, %s8, %s6
  // Predicated region
  $region2: #{eegcnn_forward.3} parent=0 // pred_check
    _
  $region3: #{eegcnn_forward.3} parent=0 // pred_check_branch
    %11 = sbr.rel (0) target = $region5
  $region4: #{eegcnn_forward.3} parent=0 // pred_region
    _
  $region5: #{eegcnn_forward.3} parent=0 // pred_fallthru
    _
  // Predicated region
  $region6: #{eegcnn_forward.3} parent=0 // pred_check
    _
  $region7: #{eegcnn_forward.3} parent=0 // pred_check_branch
    %13 = sbr.rel (0) target = $region9
  $region8: #{eegcnn_forward.3} parent=0 // pred_region
    _
  $region9: #{eegcnn_forward.3} parent=0 // pred_fallthru
    _
  // Predicated region
  $region10: #{eegcnn_forward.3} parent=0 // pred_check
    _
  $region11: #{eegcnn_forward.3} parent=0 // pred_check_branch
    %15 = sbr.rel (0) target = $region13
  $region12: #{eegcnn_forward.3} parent=0 // pred_region
    _
  $region13: #{eegcnn_forward.3} parent=0 // pred_fallthru
    _
  // Predicated region
  $region14: #{eegcnn_forward.3} parent=0 // pred_check
    _
  $region15: #{eegcnn_forward.3} parent=0 // pred_check_branch
    %17 = sbr.rel (0) target = $region17
  $region16: #{eegcnn_forward.3} parent=0 // pred_region
    _
  $region17: #{eegcnn_forward.3} parent=0 // pred_fallthru
    _
  // Predicated region
  $region18: #{eegcnn_forward.3} parent=0 // pred_check
    _
  $region19: #{eegcnn_forward.3} parent=0 // pred_check_branch
    %19 = sbr.rel (0) target = $region21
  $region20: #{eegcnn_forward.3} parent=0 // pred_region
    _
  $region21: #{eegcnn_forward.3} parent=0 // pred_fallthru
    _
  %v21 = vld [vmem:[%s0] sm:$0xf]
  %v22 = vld [vmem:[%s0 + $0x4] sm:$0xf]
  %v23 = vld [vmem:[%s0 + $0x8] sm:$0xf]
  %v24 = vld [vmem:[%s0 + $0xc] sm:$0xf]
  %v25 = vld [vmem:[%s0 + $0x10] sm:$0xf]
  %v26 = vld [vmem:[%s0 + $0x14] sm:$0xf]
  %v27 = vld [vmem:[%s0 + $0x18] sm:$0xf]
  %v28 = vld [vmem:[%s0 + $0x1c] sm:$0xf]
  %v29 = vld [vmem:[%s0 + $0x20] sm:$0xf]
  %v30 = vld [vmem:[%s0 + $0x24] sm:$0xf]
  %v31 = vld [vmem:[%s0 + $0x28] sm:$0xf]
  %v32 = vld [vmem:[%s0 + $0x2c] sm:$0xf]
  %v33 = vld [vmem:[%s0 + $0x30] sm:$0xf]
  %v34 = vld [vmem:[%s0 + $0x34] sm:$0xf]
  %v35 = vld [vmem:[%s0 + $0x38] sm:$0xf]
  %v36 = vld [vmem:[%s0 + $0x3c] sm:$0xf]
  %v37 = vld [vmem:[%s0 + $0x40] sm:$0xf]
  %v38 = vld [vmem:[%s0 + $0x44] sm:$0xf]
  %v39 = vld [vmem:[%s0 + $0x48] sm:$0xf]
  %v40 = vld [vmem:[%s0 + $0x4c] sm:$0xf]
  %v41 = vld [vmem:[%s0 + $0x50] sm:$0xf]
  %v42 = vld [vmem:[%s0 + $0x54] sm:$0xf]
  %v43 = vld [vmem:[%s0 + $0x58] sm:$0xf]
  %v44 = vld [vmem:[%s0 + $0x5c] sm:$0xf]
  %v45 = vld [vmem:[%s0 + $0x60] sm:$0xf]
  %v46 = vld [vmem:[%s0 + $0x64] sm:$0xf]
  %v47 = vld [vmem:[%s0 + $0x68] sm:$0xf]
  %v48 = vld [vmem:[%s0 + $0x6c] sm:$0xf]
  %v49 = vld [vmem:[%s0 + $0x70] sm:$0xf]
  %v50 = vld [vmem:[%s0 + $0x74] sm:$0xf]
  %v51 = vld [vmem:[%s0 + $0x78] sm:$0xf]
  %v52 = vld [vmem:[%s0 + $0x7c] sm:$0xf]
  %v53 = vld [vmem:[%s0 + $0x80] sm:$0xf]
  %v54 = vld [vmem:[%s0 + $0x84] sm:$0xf]
  %v55 = vld [vmem:[%s0 + $0x88] sm:$0xf]
  %v56 = vld [vmem:[%s0 + $0x8c] sm:$0xf]
  %v57 = vld [vmem:[%s0 + $0x90] sm:$0xf]
  %v58 = vld [vmem:[%s0 + $0x94] sm:$0xf]
  %v59 = vld [vmem:[%s0 + $0x98] sm:$0xf]
  %v60 = vld [vmem:[%s0 + $0x9c] sm:$0xf]
  %v61 = vld [vmem:[%s0 + $0xa0] sm:$0xf]
  %v62 = vld [vmem:[%s0 + $0xa4] sm:$0xf]
  %v63 = vld [vmem:[%s0 + $0xa8] sm:$0xf]
  %v64 = vld [vmem:[%s0 + $0xac] sm:$0xf]
  %v65 = vld [vmem:[%s0 + $0xb0] sm:$0xf]
  %v66 = vld [vmem:[%s0 + $0xb4] sm:$0xf]
  %v67 = vld [vmem:[%s0 + $0xb8] sm:$0xf]
  %v68 = vld [vmem:[%s0 + $0xbc] sm:$0xf]
  %v69 = vld [vmem:[%s0 + $0xc0] sm:$0xf]
  %v70 = vld [vmem:[%s0 + $0xc4] sm:$0xf]
  %v71 = vld [vmem:[%s0 + $0xc8] sm:$0xf]
  %v72 = vld [vmem:[%s0 + $0xcc] sm:$0xf]
  %v73 = vld [vmem:[%s0 + $0xd0] sm:$0xf]
  %v74 = vld [vmem:[%s0 + $0xd4] sm:$0xf]
  %v75 = vld [vmem:[%s0 + $0xd8] sm:$0xf]
  %v76 = vld [vmem:[%s0 + $0xdc] sm:$0xf]
  %v77 = vld [vmem:[%s0 + $0xe0] sm:$0xf]
  %v78 = vld [vmem:[%s0 + $0xe4] sm:$0xf]
  %v79 = vld [vmem:[%s0 + $0xe8] sm:$0xf]
  %v80 = vld [vmem:[%s0 + $0xec] sm:$0xf]
  %v81 = vld [vmem:[%s0 + $0xf0] sm:$0xf]
  %v82 = vld [vmem:[%s0 + $0xf4] sm:$0xf]
  %v83 = vld [vmem:[%s0 + $0xf8] sm:$0xf]
  %v84 = vld [vmem:[%s0 + $0xfc] sm:$0xf]
  %v85 = vld [vmem:[%s0 + $0x100] sm:$0xf]
  %v86 = vld [vmem:[%s0 + $0x104] sm:$0xf]
  %v87 = vld [vmem:[%s0 + $0x108] sm:$0xf]
  %v88 = vld [vmem:[%s0 + $0x10c] sm:$0xf]
  %v89 = vld [vmem:[%s0 + $0x110] sm:$0xf]
  %v90 = vld [vmem:[%s0 + $0x114] sm:$0xf]
  %v91 = vld [vmem:[%s0 + $0x118] sm:$0xf]
  %v92 = vld [vmem:[%s0 + $0x11c] sm:$0xf]
  %v93 = vld [vmem:[%s0 + $0x120] sm:$0xf]
  %v94 = vld [vmem:[%s0 + $0x124] sm:$0xf]
  %v95 = vld [vmem:[%s0 + $0x128] sm:$0xf]
  %v96 = vld [vmem:[%s0 + $0x12c] sm:$0xf]
  %v97 = vld [vmem:[%s0 + $0x130] sm:$0xf]
  %v98 = vld [vmem:[%s0 + $0x134] sm:$0xf]
  %v99 = vld [vmem:[%s0 + $0x138] sm:$0xf]
  %v100 = vld [vmem:[%s0 + $0x13c] sm:$0xf]
  %v101 = vld [vmem:[%s0 + $0x140] sm:$0xf]
  %v102 = vld [vmem:[%s0 + $0x144] sm:$0xf]
  %v103 = vld [vmem:[%s0 + $0x148] sm:$0xf]
  %v104 = vld [vmem:[%s0 + $0x14c] sm:$0xf]
  %v105 = vld [vmem:[%s0 + $0x150] sm:$0xf]
  %v106 = vld [vmem:[%s0 + $0x154] sm:$0xf]
  %v107 = vld [vmem:[%s0 + $0x158] sm:$0xf]
  %v108 = vld [vmem:[%s0 + $0x15c] sm:$0xf]
  %v109 = vld [vmem:[%s0 + $0x160] sm:$0xf]
  %v110 = vld [vmem:[%s0 + $0x164] sm:$0xf]
  %v111 = vld [vmem:[%s0 + $0x168] sm:$0xf]
  %v112 = vld [vmem:[%s0 + $0x16c] sm:$0xf]
  %v113 = vld [vmem:[%s0 + $0x170] sm:$0xf]
  %v114 = vld [vmem:[%s0 + $0x174] sm:$0xf]
  %v115 = vld [vmem:[%s0 + $0x178] sm:$0xf]
  %v116 = vld [vmem:[%s0 + $0x17c] sm:$0xf]
  %v117 = vld [vmem:[%s0 + $0x180] sm:$0xf]
  %v118 = vld [vmem:[%s0 + $0x184] sm:$0xf]
  %v119 = vld [vmem:[%s0 + $0x188] sm:$0xf]
  %v120 = vld [vmem:[%s0 + $0x18c] sm:$0xf]
  %v121 = vld [vmem:[%s0 + $0x190] sm:$0xf]
  %v122 = vld [vmem:[%s0 + $0x194] sm:$0xf]
  %v123 = vld [vmem:[%s0 + $0x198] sm:$0xf]
  %v124 = vld [vmem:[%s0 + $0x19c] sm:$0xf]
  %v125 = vld [vmem:[%s1] sm:$0xf]
  %v126 = vld [vmem:[%s1 + $0x4] sm:$0xf]
  %v127 = vld [vmem:[%s1 + $0x8] sm:$0xf]
  %v128 = vld [vmem:[%s1 + $0xc] sm:$0xf]
  %v129 = vld [vmem:[%s1 + $0x10] sm:$0xf]
  %v130 = vld [vmem:[%s1 + $0x14] sm:$0xf]
  %v131 = vld [vmem:[%s1 + $0x18] sm:$0xf]
  %v132 = vld [vmem:[%s1 + $0x1c] sm:$0xf]
  %v133 = vld [vmem:[%s1 + $0x20] sm:$0xf]
  %v134 = vld [vmem:[%s1 + $0x24] sm:$0xf]
  %v135 = vld [vmem:[%s1 + $0x28] sm:$0xf]
  %v136 = vld [vmem:[%s1 + $0x2c] sm:$0xf]
  %v137 = vld [vmem:[%s1 + $0x30] sm:$0xf]
  %v138 = vld [vmem:[%s1 + $0x34] sm:$0xf]
  %v139 = vld [vmem:[%s1 + $0x38] sm:$0xf]
  %v140 = vld [vmem:[%s1 + $0x3c] sm:$0xf]
  %v245 = vunpack.c.l.b16 %v21
  %v246 = vunpack.c.l.b16 %v22
  %v247 = vunpack.c.l.b16 %v23
  %v248 = vunpack.c.l.b16 %v24
  %v249 = vunpack.c.l.b16 %v25
  %v250 = vunpack.c.l.b16 %v26
  %v251 = vunpack.c.l.b16 %v27
  %v252 = vunpack.c.l.b16 %v28
  %v253 = vunpack.c.l.b16 %v29
  %v254 = vunpack.c.l.b16 %v30
  %v255 = vunpack.c.l.b16 %v31
  %v256 = vunpack.c.l.b16 %v32
  %v257 = vunpack.c.l.b16 %v33
  %v258 = vunpack.c.l.b16 %v34
  %v259 = vunpack.c.l.b16 %v35
  %v260 = vunpack.c.l.b16 %v36
  %v261 = vunpack.c.l.b16 %v37
  %v262 = vunpack.c.l.b16 %v38
  %v263 = vunpack.c.l.b16 %v39
  %v264 = vunpack.c.l.b16 %v40
  %v265 = vunpack.c.l.b16 %v41
  %v266 = vunpack.c.l.b16 %v42
  %v267 = vunpack.c.l.b16 %v43
  %v268 = vunpack.c.l.b16 %v44
  %v269 = vunpack.c.l.b16 %v45
  %v270 = vunpack.c.l.b16 %v46
  %v271 = vunpack.c.l.b16 %v47
  %v272 = vunpack.c.l.b16 %v48
  %v273 = vunpack.c.l.b16 %v49
  %v274 = vunpack.c.l.b16 %v50
  %v275 = vunpack.c.l.b16 %v51
  %v276 = vunpack.c.l.b16 %v52
  %v277 = vunpack.c.l.b16 %v53
  %v278 = vunpack.c.l.b16 %v54
  %v279 = vunpack.c.l.b16 %v55
  %v280 = vunpack.c.l.b16 %v56
  %v281 = vunpack.c.l.b16 %v57
  %v282 = vunpack.c.l.b16 %v58
  %v283 = vunpack.c.l.b16 %v59
  %v284 = vunpack.c.l.b16 %v60
  %v285 = vunpack.c.l.b16 %v61
  %v286 = vunpack.c.l.b16 %v62
  %v287 = vunpack.c.l.b16 %v63
  %v288 = vunpack.c.l.b16 %v64
  %v289 = vunpack.c.l.b16 %v65
  %v290 = vunpack.c.l.b16 %v66
  %v291 = vunpack.c.l.b16 %v67
  %v292 = vunpack.c.l.b16 %v68
  %v293 = vunpack.c.l.b16 %v69
  %v294 = vunpack.c.l.b16 %v70
  %v295 = vunpack.c.l.b16 %v71
  %v296 = vunpack.c.l.b16 %v72
  %v297 = vunpack.c.l.b16 %v73
  %v298 = vunpack.c.l.b16 %v74
  %v299 = vunpack.c.l.b16 %v75
  %v300 = vunpack.c.l.b16 %v76
  %v301 = vunpack.c.l.b16 %v77
  %v302 = vunpack.c.l.b16 %v78
  %v303 = vunpack.c.l.b16 %v79
  %v304 = vunpack.c.l.b16 %v80
  %v305 = vunpack.c.l.b16 %v81
  %v306 = vunpack.c.l.b16 %v82
  %v307 = vunpack.c.l.b16 %v83
  %v308 = vunpack.c.l.b16 %v84
  %v309 = vunpack.c.l.b16 %v85
  %v310 = vunpack.c.l.b16 %v86
  %v311 = vunpack.c.l.b16 %v87
  %v312 = vunpack.c.l.b16 %v88
  %v313 = vunpack.c.l.b16 %v89
  %v314 = vunpack.c.l.b16 %v90
  %v315 = vunpack.c.l.b16 %v91
  %v316 = vunpack.c.l.b16 %v92
  %v317 = vunpack.c.l.b16 %v93
  %v318 = vunpack.c.l.b16 %v94
  %v319 = vunpack.c.l.b16 %v95
  %v320 = vunpack.c.l.b16 %v96
  %v321 = vunpack.c.l.b16 %v97
  %v322 = vunpack.c.l.b16 %v98
  %v323 = vunpack.c.l.b16 %v99
  %v324 = vunpack.c.l.b16 %v100
  %v325 = vunpack.c.l.b16 %v101
  %v326 = vunpack.c.l.b16 %v102
  %v327 = vunpack.c.l.b16 %v103
  %v328 = vunpack.c.l.b16 %v104
  %v329 = vunpack.c.l.b16 %v105
  %v330 = vunpack.c.l.b16 %v106
  %v331 = vunpack.c.l.b16 %v107
  %v332 = vunpack.c.l.b16 %v108
  %v333 = vunpack.c.l.b16 %v109
  %v334 = vunpack.c.l.b16 %v110
  %v335 = vunpack.c.l.b16 %v111
  %v336 = vunpack.c.l.b16 %v112
  %v337 = vunpack.c.l.b16 %v113
  %v338 = vunpack.c.l.b16 %v114
  %v339 = vunpack.c.l.b16 %v115
  %v340 = vunpack.c.l.b16 %v116
  %v341 = vunpack.c.l.b16 %v117
  %v342 = vunpack.c.l.b16 %v118
  %v343 = vunpack.c.l.b16 %v119
  %v344 = vunpack.c.l.b16 %v120
  %v345 = vunpack.c.l.b16 %v121
  %v346 = vunpack.c.l.b16 %v122
  %v347 = vunpack.c.l.b16 %v123
  %v348 = vunpack.c.l.b16 %v124
  %v349 = vpack.c.b16 %v246, %v245
  %v350 = vpack.c.b16 %v248, %v247
  %v351 = vpack.c.b16 %v250, %v249
  %v352 = vpack.c.b16 %v252, %v251
  %v353 = vpack.c.b16 %v254, %v253
  %v354 = vpack.c.b16 %v256, %v255
  %v355 = vpack.c.b16 %v258, %v257
  %v356 = vpack.c.b16 %v260, %v259
  %v357 = vpack.c.b16 %v262, %v261
  %v358 = vpack.c.b16 %v264, %v263
  %v359 = vpack.c.b16 %v266, %v265
  %v360 = vpack.c.b16 %v268, %v267
  %v361 = vpack.c.b16 %v270, %v269
  %v362 = vpack.c.b16 %v272, %v271
  %v363 = vpack.c.b16 %v274, %v273
  %v364 = vpack.c.b16 %v276, %v275
  %v365 = vpack.c.b16 %v278, %v277
  %v366 = vpack.c.b16 %v280, %v279
  %v367 = vpack.c.b16 %v282, %v281
  %v368 = vpack.c.b16 %v284, %v283
  %v369 = vpack.c.b16 %v286, %v285
  %v370 = vpack.c.b16 %v288, %v287
  %v371 = vpack.c.b16 %v290, %v289
  %v372 = vpack.c.b16 %v292, %v291
  %v373 = vpack.c.b16 %v294, %v293
  %v374 = vpack.c.b16 %v296, %v295
  %v375 = vpack.c.b16 %v298, %v297
  %v376 = vpack.c.b16 %v300, %v299
  %v377 = vpack.c.b16 %v302, %v301
  %v378 = vpack.c.b16 %v304, %v303
  %v379 = vpack.c.b16 %v306, %v305
  %v380 = vpack.c.b16 %v308, %v307
  %v381 = vpack.c.b16 %v310, %v309
  %v382 = vpack.c.b16 %v312, %v311
  %v383 = vpack.c.b16 %v314, %v313
  %v384 = vpack.c.b16 %v316, %v315
  %v385 = vpack.c.b16 %v318, %v317
  %v386 = vpack.c.b16 %v320, %v319
  %v387 = vpack.c.b16 %v322, %v321
  %v388 = vpack.c.b16 %v324, %v323
  %v389 = vpack.c.b16 %v326, %v325
  %v390 = vpack.c.b16 %v328, %v327
  %v391 = vpack.c.b16 %v330, %v329
  %v392 = vpack.c.b16 %v332, %v331
  %v393 = vpack.c.b16 %v334, %v333
  %v394 = vpack.c.b16 %v336, %v335
  %v395 = vpack.c.b16 %v338, %v337
  %v396 = vpack.c.b16 %v340, %v339
  %v397 = vpack.c.b16 %v342, %v341
  %v398 = vpack.c.b16 %v344, %v343
  %v399 = vpack.c.b16 %v346, %v345
  %v400 = vpack.c.b16 %v348, %v347
  %v469 = vunpack.c.l.b16 %v125
  %v470 = vunpack.c.l.b16 %v126
  %v471 = vunpack.c.l.b16 %v127
  %v472 = vunpack.c.l.b16 %v128
  %v473 = vunpack.c.l.b16 %v129
  %v474 = vunpack.c.l.b16 %v130
  %v475 = vunpack.c.l.b16 %v131
  %v476 = vunpack.c.l.b16 %v132
  %v477 = vunpack.c.l.b16 %v133
  %v478 = vunpack.c.l.b16 %v134
  %v479 = vunpack.c.l.b16 %v135
  %v480 = vunpack.c.l.b16 %v136
  %v481 = vunpack.c.l.b16 %v137
  %v482 = vunpack.c.l.b16 %v138
  %v483 = vunpack.c.l.b16 %v139
  %v484 = vunpack.c.l.b16 %v140
  %v485 = vpack.c.b16 %v470, %v469
  %v486 = vpack.c.b16 %v472, %v471
  %v487 = vpack.c.b16 %v474, %v473
  %v488 = vpack.c.b16 %v476, %v475
  %v489 = vpack.c.b16 %v478, %v477
  %v490 = vpack.c.b16 %v480, %v479
  %v491 = vpack.c.b16 %v482, %v481
  %v492 = vpack.c.b16 %v484, %v483
  %501 = vmatprep.subr.bf16.mxu0 0
  %502 = vmatpush1.bf16.msra.mxu0 %v492
  %503 = vmatprep.subr.bf16.mxu0 0
  %504 = vmatpush1.bf16.msra.mxu0 %v491
  %505 = vmatprep.subr.bf16.mxu0 0
  %506 = vmatpush1.bf16.msra.mxu0 %v490
  %507 = vmatprep.subr.bf16.mxu0 0
  %508 = vmatpush1.bf16.msra.mxu0 %v489
  %509 = vmatprep.subr.bf16.mxu0 0
  %510 = vmatpush1.bf16.msra.mxu0 %v488
  %511 = vmatprep.subr.bf16.mxu0 0
  %512 = vmatpush1.bf16.msra.mxu0 %v487
  %513 = vmatprep.subr.bf16.mxu0 0
  %514 = vmatpush1.bf16.msra.mxu0 %v486
  %515 = vmatprep.subr.bf16.mxu0 0
  %516 = vmatpush1.bf16.msra.mxu0 %v485
  %517 = vmatprep.subr.bf16.mxu0 0
  %518 = vmatpush2.bf16.msra.mxu0 0
  %519 = vmatprep.subr.bf16.mxu0 0
  %520 = vmatpush2.bf16.msra.mxu0 0
  %521 = vmatprep.subr.bf16.mxu0 0
  %522 = vmatpush2.bf16.msra.mxu0 0
  %523 = vmatprep.subr.bf16.mxu0 0
  %524 = vmatpush2.bf16.msra.mxu0 0
  %525 = vmatprep.subr.bf16.mxu0 0
  %526 = vmatpush2.bf16.msra.mxu0 0
  %527 = vmatprep.subr.bf16.mxu0 0
  %528 = vmatpush2.bf16.msra.mxu0 0
  %529 = vmatprep.subr.bf16.mxu0 0
  %530 = vmatpush2.bf16.msra.mxu0 0
  %531 = vmatprep.subr.bf16.mxu0 0
  %532 = vmatpush2.bf16.msra.mxu0 0
  %533 = vmatprep.mubr.bf16.mxu0 0
  %534 = vmatmul.mubr.bf16.gmra.mxu0 %v349
  %v535 = vpop.f32.mrf.mxu0
  %v536 = vadd.f32 0.0, %v535
  %v537 = vpop.f32.mrf.mxu0
  %v538 = vpop.f32.mrf.mxu0
  %v539 = vadd.f32 0.0, %v538
  %v540 = vpop.f32.mrf.mxu0
  %541 = vmatprep.mubr.bf16.mxu0 0
  %542 = vmatmul.mubr.bf16.gmra.mxu0 %v350
  %v543 = vpop.f32.mrf.mxu0
  %v544 = vadd.f32 0.0, %v543
  %v545 = vpop.f32.mrf.mxu0
  %v546 = vpop.f32.mrf.mxu0
  %v547 = vadd.f32 0.0, %v546
  %v548 = vpop.f32.mrf.mxu0
  %549 = vmatprep.mubr.bf16.mxu0 0
  %550 = vmatmul.mubr.bf16.gmra.mxu0 %v351
  %v551 = vpop.f32.mrf.mxu0
  %v552 = vadd.f32 0.0, %v551
  %v553 = vpop.f32.mrf.mxu0
  %v554 = vpop.f32.mrf.mxu0
  %v555 = vadd.f32 0.0, %v554
  %v556 = vpop.f32.mrf.mxu0
  %557 = vmatprep.mubr.bf16.mxu0 0
  %558 = vmatmul.mubr.bf16.gmra.mxu0 %v352
  %v559 = vpop.f32.mrf.mxu0
  %v560 = vadd.f32 0.0, %v559
  %v561 = vpop.f32.mrf.mxu0
  %v562 = vpop.f32.mrf.mxu0
  %v563 = vadd.f32 0.0, %v562
  %v564 = vpop.f32.mrf.mxu0
  %565 = vmatprep.mubr.bf16.mxu0 0
  %566 = vmatmul.mubr.bf16.gmra.mxu0 %v353
  %v567 = vpop.f32.mrf.mxu0
  %v568 = vadd.f32 0.0, %v567
  %v569 = vpop.f32.mrf.mxu0
  %v570 = vpop.f32.mrf.mxu0
  %v571 = vadd.f32 0.0, %v570
  %v572 = vpop.f32.mrf.mxu0
  %573 = vmatprep.mubr.bf16.mxu0 0
  %574 = vmatmul.mubr.bf16.gmra.mxu0 %v354
  %v575 = vpop.f32.mrf.mxu0
  %v576 = vadd.f32 0.0, %v575
  %v577 = vpop.f32.mrf.mxu0
  %v578 = vpop.f32.mrf.mxu0
  %v579 = vadd.f32 0.0, %v578
  %v580 = vpop.f32.mrf.mxu0
  %581 = vmatprep.mubr.bf16.mxu0 0
  %582 = vmatmul.mubr.bf16.gmra.mxu0 %v355
  %v583 = vpop.f32.mrf.mxu0
  %v584 = vadd.f32 0.0, %v583
  %v585 = vpop.f32.mrf.mxu0
  %v586 = vpop.f32.mrf.mxu0
  %v587 = vadd.f32 0.0, %v586
  %v588 = vpop.f32.mrf.mxu0
  %589 = vmatprep.mubr.bf16.mxu0 0
  %590 = vmatmul.mubr.bf16.gmra.mxu0 %v356
  %v591 = vpop.f32.mrf.mxu0
  %v592 = vadd.f32 0.0, %v591
  %v593 = vpop.f32.mrf.mxu0
  %v594 = vpop.f32.mrf.mxu0
  %v595 = vadd.f32 0.0, %v594
  %v596 = vpop.f32.mrf.mxu0
  %597 = vmatprep.mubr.bf16.mxu0 0
  %598 = vmatmul.mubr.bf16.gmra.mxu0 %v357
  %v599 = vpop.f32.mrf.mxu0
  %v600 = vadd.f32 0.0, %v599
  %v601 = vpop.f32.mrf.mxu0
  %v602 = vpop.f32.mrf.mxu0
  %v603 = vadd.f32 0.0, %v602
  %v604 = vpop.f32.mrf.mxu0
  %605 = vmatprep.mubr.bf16.mxu0 0
  %606 = vmatmul.mubr.bf16.gmra.mxu0 %v358
  %v607 = vpop.f32.mrf.mxu0
  %v608 = vadd.f32 0.0, %v607
  %v609 = vpop.f32.mrf.mxu0
  %v610 = vpop.f32.mrf.mxu0
  %v611 = vadd.f32 0.0, %v610
  %v612 = vpop.f32.mrf.mxu0
  %613 = vmatprep.mubr.bf16.mxu0 0
  %614 = vmatmul.mubr.bf16.gmra.mxu0 %v359
  %v615 = vpop.f32.mrf.mxu0
  %v616 = vadd.f32 0.0, %v615
  %v617 = vpop.f32.mrf.mxu0
  %v618 = vpop.f32.mrf.mxu0
  %v619 = vadd.f32 0.0, %v618
  %v620 = vpop.f32.mrf.mxu0
  %621 = vmatprep.mubr.bf16.mxu0 0
  %622 = vmatmul.mubr.bf16.gmra.mxu0 %v360
  %v623 = vpop.f32.mrf.mxu0
  %v624 = vadd.f32 0.0, %v623
  %v625 = vpop.f32.mrf.mxu0
  %v626 = vpop.f32.mrf.mxu0
  %v627 = vadd.f32 0.0, %v626
  %v628 = vpop.f32.mrf.mxu0
  %629 = vmatprep.mubr.bf16.mxu0 0
  %630 = vmatmul.mubr.bf16.gmra.mxu0 %v361
  %v631 = vpop.f32.mrf.mxu0
  %v632 = vadd.f32 0.0, %v631
  %v633 = vpop.f32.mrf.mxu0
  %v634 = vpop.f32.mrf.mxu0
  %v635 = vadd.f32 0.0, %v634
  %v636 = vpop.f32.mrf.mxu0
  %637 = vmatprep.mubr.bf16.mxu0 0
  %638 = vmatmul.mubr.bf16.gmra.mxu0 %v362
  %v639 = vpop.f32.mrf.mxu0
  %v640 = vadd.f32 0.0, %v639
  %v641 = vpop.f32.mrf.mxu0
  %v642 = vpop.f32.mrf.mxu0
  %v643 = vadd.f32 0.0, %v642
  %v644 = vpop.f32.mrf.mxu0
  %645 = vmatprep.mubr.bf16.mxu0 0
  %646 = vmatmul.mubr.bf16.gmra.mxu0 %v363
  %v647 = vpop.f32.mrf.mxu0
  %v648 = vadd.f32 0.0, %v647
  %v649 = vpop.f32.mrf.mxu0
  %v650 = vpop.f32.mrf.mxu0
  %v651 = vadd.f32 0.0, %v650
  %v652 = vpop.f32.mrf.mxu0
  %653 = vmatprep.mubr.bf16.mxu0 0
  %654 = vmatmul.mubr.bf16.gmra.mxu0 %v364
  %v655 = vpop.f32.mrf.mxu0
  %v656 = vadd.f32 0.0, %v655
  %v657 = vpop.f32.mrf.mxu0
  %v658 = vpop.f32.mrf.mxu0
  %v659 = vadd.f32 0.0, %v658
  %v660 = vpop.f32.mrf.mxu0
  %661 = vmatprep.mubr.bf16.mxu0 0
  %662 = vmatmul.mubr.bf16.gmra.mxu0 %v365
  %v663 = vpop.f32.mrf.mxu0
  %v664 = vadd.f32 0.0, %v663
  %v665 = vpop.f32.mrf.mxu0
  %v666 = vpop.f32.mrf.mxu0
  %v667 = vadd.f32 0.0, %v666
  %v668 = vpop.f32.mrf.mxu0
  %669 = vmatprep.mubr.bf16.mxu0 0
  %670 = vmatmul.mubr.bf16.gmra.mxu0 %v366
  %v671 = vpop.f32.mrf.mxu0
  %v672 = vadd.f32 0.0, %v671
  %v673 = vpop.f32.mrf.mxu0
  %v674 = vpop.f32.mrf.mxu0
  %v675 = vadd.f32 0.0, %v674
  %v676 = vpop.f32.mrf.mxu0
  %677 = vmatprep.mubr.bf16.mxu0 0
  %678 = vmatmul.mubr.bf16.gmra.mxu0 %v367
  %v679 = vpop.f32.mrf.mxu0
  %v680 = vadd.f32 0.0, %v679
  %v681 = vpop.f32.mrf.mxu0
  %v682 = vpop.f32.mrf.mxu0
  %v683 = vadd.f32 0.0, %v682
  %v684 = vpop.f32.mrf.mxu0
  %685 = vmatprep.mubr.bf16.mxu0 0
  %686 = vmatmul.mubr.bf16.gmra.mxu0 %v368
  %v687 = vpop.f32.mrf.mxu0
  %v688 = vadd.f32 0.0, %v687
  %v689 = vpop.f32.mrf.mxu0
  %v690 = vpop.f32.mrf.mxu0
  %v691 = vadd.f32 0.0, %v690
  %v692 = vpop.f32.mrf.mxu0
  %693 = vmatprep.mubr.bf16.mxu0 0
  %694 = vmatmul.mubr.bf16.gmra.mxu0 %v369
  %v695 = vpop.f32.mrf.mxu0
  %v696 = vadd.f32 0.0, %v695
  %v697 = vpop.f32.mrf.mxu0
  %v698 = vpop.f32.mrf.mxu0
  %v699 = vadd.f32 0.0, %v698
  %v700 = vpop.f32.mrf.mxu0
  %701 = vmatprep.mubr.bf16.mxu0 0
  %702 = vmatmul.mubr.bf16.gmra.mxu0 %v370
  %v703 = vpop.f32.mrf.mxu0
  %v704 = vadd.f32 0.0, %v703
  %v705 = vpop.f32.mrf.mxu0
  %v706 = vpop.f32.mrf.mxu0
  %v707 = vadd.f32 0.0, %v706
  %v708 = vpop.f32.mrf.mxu0
  %709 = vmatprep.mubr.bf16.mxu0 0
  %710 = vmatmul.mubr.bf16.gmra.mxu0 %v371
  %v711 = vpop.f32.mrf.mxu0
  %v712 = vadd.f32 0.0, %v711
  %v713 = vpop.f32.mrf.mxu0
  %v714 = vpop.f32.mrf.mxu0
  %v715 = vadd.f32 0.0, %v714
  %v716 = vpop.f32.mrf.mxu0
  %717 = vmatprep.mubr.bf16.mxu0 0
  %718 = vmatmul.mubr.bf16.gmra.mxu0 %v372
  %v719 = vpop.f32.mrf.mxu0
  %v720 = vadd.f32 0.0, %v719
  %v721 = vpop.f32.mrf.mxu0
  %v722 = vpop.f32.mrf.mxu0
  %v723 = vadd.f32 0.0, %v722
  %v724 = vpop.f32.mrf.mxu0
  %725 = vmatprep.mubr.bf16.mxu0 0
  %726 = vmatmul.mubr.bf16.gmra.mxu0 %v373
  %v727 = vpop.f32.mrf.mxu0
  %v728 = vadd.f32 0.0, %v727
  %v729 = vpop.f32.mrf.mxu0
  %v730 = vpop.f32.mrf.mxu0
  %v731 = vadd.f32 0.0, %v730
  %v732 = vpop.f32.mrf.mxu0
  %733 = vmatprep.mubr.bf16.mxu0 0
  %734 = vmatmul.mubr.bf16.gmra.mxu0 %v374
  %v735 = vpop.f32.mrf.mxu0
  %v736 = vadd.f32 0.0, %v735
  %v737 = vpop.f32.mrf.mxu0
  %v738 = vpop.f32.mrf.mxu0
  %v739 = vadd.f32 0.0, %v738
  %v740 = vpop.f32.mrf.mxu0
  %741 = vmatprep.mubr.bf16.mxu0 0
  %742 = vmatmul.mubr.bf16.gmra.mxu0 %v375
  %v743 = vpop.f32.mrf.mxu0
  %v744 = vadd.f32 0.0, %v743
  %v745 = vpop.f32.mrf.mxu0
  %v746 = vpop.f32.mrf.mxu0
  %v747 = vadd.f32 0.0, %v746
  %v748 = vpop.f32.mrf.mxu0
  %749 = vmatprep.mubr.bf16.mxu0 0
  %750 = vmatmul.mubr.bf16.gmra.mxu0 %v376
  %v751 = vpop.f32.mrf.mxu0
  %v752 = vadd.f32 0.0, %v751
  %v753 = vpop.f32.mrf.mxu0
  %v754 = vpop.f32.mrf.mxu0
  %v755 = vadd.f32 0.0, %v754
  %v756 = vpop.f32.mrf.mxu0
  %757 = vmatprep.mubr.bf16.mxu0 0
  %758 = vmatmul.mubr.bf16.gmra.mxu0 %v377
  %v759 = vpop.f32.mrf.mxu0
  %v760 = vadd.f32 0.0, %v759
  %v761 = vpop.f32.mrf.mxu0
  %v762 = vpop.f32.mrf.mxu0
  %v763 = vadd.f32 0.0, %v762
  %v764 = vpop.f32.mrf.mxu0
  %765 = vmatprep.mubr.bf16.mxu0 0
  %766 = vmatmul.mubr.bf16.gmra.mxu0 %v378
  %v767 = vpop.f32.mrf.mxu0
  %v768 = vadd.f32 0.0, %v767
  %v769 = vpop.f32.mrf.mxu0
  %v770 = vpop.f32.mrf.mxu0
  %v771 = vadd.f32 0.0, %v770
  %v772 = vpop.f32.mrf.mxu0
  %773 = vmatprep.mubr.bf16.mxu0 0
  %774 = vmatmul.mubr.bf16.gmra.mxu0 %v379
  %v775 = vpop.f32.mrf.mxu0
  %v776 = vadd.f32 0.0, %v775
  %v777 = vpop.f32.mrf.mxu0
  %v778 = vpop.f32.mrf.mxu0
  %v779 = vadd.f32 0.0, %v778
  %v780 = vpop.f32.mrf.mxu0
  %781 = vmatprep.mubr.bf16.mxu0 0
  %782 = vmatmul.mubr.bf16.gmra.mxu0 %v380
  %v783 = vpop.f32.mrf.mxu0
  %v784 = vadd.f32 0.0, %v783
  %v785 = vpop.f32.mrf.mxu0
  %v786 = vpop.f32.mrf.mxu0
  %v787 = vadd.f32 0.0, %v786
  %v788 = vpop.f32.mrf.mxu0
  %789 = vmatprep.mubr.bf16.mxu0 0
  %790 = vmatmul.mubr.bf16.gmra.mxu0 %v381
  %v791 = vpop.f32.mrf.mxu0
  %v792 = vadd.f32 0.0, %v791
  %v793 = vpop.f32.mrf.mxu0
  %v794 = vpop.f32.mrf.mxu0
  %v795 = vadd.f32 0.0, %v794
  %v796 = vpop.f32.mrf.mxu0
  %797 = vmatprep.mubr.bf16.mxu0 0
  %798 = vmatmul.mubr.bf16.gmra.mxu0 %v382
  %v799 = vpop.f32.mrf.mxu0
  %v800 = vadd.f32 0.0, %v799
  %v801 = vpop.f32.mrf.mxu0
  %v802 = vpop.f32.mrf.mxu0
  %v803 = vadd.f32 0.0, %v802
  %v804 = vpop.f32.mrf.mxu0
  %805 = vmatprep.mubr.bf16.mxu0 0
  %806 = vmatmul.mubr.bf16.gmra.mxu0 %v383
  %v807 = vpop.f32.mrf.mxu0
  %v808 = vadd.f32 0.0, %v807
  %v809 = vpop.f32.mrf.mxu0
  %v810 = vpop.f32.mrf.mxu0
  %v811 = vadd.f32 0.0, %v810
  %v812 = vpop.f32.mrf.mxu0
  %813 = vmatprep.mubr.bf16.mxu0 0
  %814 = vmatmul.mubr.bf16.gmra.mxu0 %v384
  %v815 = vpop.f32.mrf.mxu0
  %v816 = vadd.f32 0.0, %v815
  %v817 = vpop.f32.mrf.mxu0
  %v818 = vpop.f32.mrf.mxu0
  %v819 = vadd.f32 0.0, %v818
  %v820 = vpop.f32.mrf.mxu0
  %821 = vmatprep.mubr.bf16.mxu0 0
  %822 = vmatmul.mubr.bf16.gmra.mxu0 %v385
  %v823 = vpop.f32.mrf.mxu0
  %v824 = vadd.f32 0.0, %v823
  %v825 = vpop.f32.mrf.mxu0
  %v826 = vpop.f32.mrf.mxu0
  %v827 = vadd.f32 0.0, %v826
  %v828 = vpop.f32.mrf.mxu0
  %829 = vmatprep.mubr.bf16.mxu0 0
  %830 = vmatmul.mubr.bf16.gmra.mxu0 %v386
  %v831 = vpop.f32.mrf.mxu0
  %v832 = vadd.f32 0.0, %v831
  %v833 = vpop.f32.mrf.mxu0
  %v834 = vpop.f32.mrf.mxu0
  %v835 = vadd.f32 0.0, %v834
  %v836 = vpop.f32.mrf.mxu0
  %837 = vmatprep.mubr.bf16.mxu0 0
  %838 = vmatmul.mubr.bf16.gmra.mxu0 %v387
  %v839 = vpop.f32.mrf.mxu0
  %v840 = vadd.f32 0.0, %v839
  %v841 = vpop.f32.mrf.mxu0
  %v842 = vpop.f32.mrf.mxu0
  %v843 = vadd.f32 0.0, %v842
  %v844 = vpop.f32.mrf.mxu0
  %845 = vmatprep.mubr.bf16.mxu0 0
  %846 = vmatmul.mubr.bf16.gmra.mxu0 %v388
  %v847 = vpop.f32.mrf.mxu0
  %v848 = vadd.f32 0.0, %v847
  %v849 = vpop.f32.mrf.mxu0
  %v850 = vpop.f32.mrf.mxu0
  %v851 = vadd.f32 0.0, %v850
  %v852 = vpop.f32.mrf.mxu0
  %853 = vmatprep.mubr.bf16.mxu0 0
  %854 = vmatmul.mubr.bf16.gmra.mxu0 %v389
  %v855 = vpop.f32.mrf.mxu0
  %v856 = vadd.f32 0.0, %v855
  %v857 = vpop.f32.mrf.mxu0
  %v858 = vpop.f32.mrf.mxu0
  %v859 = vadd.f32 0.0, %v858
  %v860 = vpop.f32.mrf.mxu0
  %861 = vmatprep.mubr.bf16.mxu0 0
  %862 = vmatmul.mubr.bf16.gmra.mxu0 %v390
  %v863 = vpop.f32.mrf.mxu0
  %v864 = vadd.f32 0.0, %v863
  %v865 = vpop.f32.mrf.mxu0
  %v866 = vpop.f32.mrf.mxu0
  %v867 = vadd.f32 0.0, %v866
  %v868 = vpop.f32.mrf.mxu0
  %869 = vmatprep.mubr.bf16.mxu0 0
  %870 = vmatmul.mubr.bf16.gmra.mxu0 %v391
  %v871 = vpop.f32.mrf.mxu0
  %v872 = vadd.f32 0.0, %v871
  %v873 = vpop.f32.mrf.mxu0
  %v874 = vpop.f32.mrf.mxu0
  %v875 = vadd.f32 0.0, %v874
  %v876 = vpop.f32.mrf.mxu0
  %877 = vmatprep.mubr.bf16.mxu0 0
  %878 = vmatmul.mubr.bf16.gmra.mxu0 %v392
  %v879 = vpop.f32.mrf.mxu0
  %v880 = vadd.f32 0.0, %v879
  %v881 = vpop.f32.mrf.mxu0
  %v882 = vpop.f32.mrf.mxu0
  %v883 = vadd.f32 0.0, %v882
  %v884 = vpop.f32.mrf.mxu0
  %885 = vmatprep.mubr.bf16.mxu0 0
  %886 = vmatmul.mubr.bf16.gmra.mxu0 %v393
  %v887 = vpop.f32.mrf.mxu0
  %v888 = vadd.f32 0.0, %v887
  %v889 = vpop.f32.mrf.mxu0
  %v890 = vpop.f32.mrf.mxu0
  %v891 = vadd.f32 0.0, %v890
  %v892 = vpop.f32.mrf.mxu0
  %893 = vmatprep.mubr.bf16.mxu0 0
  %894 = vmatmul.mubr.bf16.gmra.mxu0 %v394
  %v895 = vpop.f32.mrf.mxu0
  %v896 = vadd.f32 0.0, %v895
  %v897 = vpop.f32.mrf.mxu0
  %v898 = vpop.f32.mrf.mxu0
  %v899 = vadd.f32 0.0, %v898
  %v900 = vpop.f32.mrf.mxu0
  %901 = vmatprep.mubr.bf16.mxu0 0
  %902 = vmatmul.mubr.bf16.gmra.mxu0 %v395
  %v903 = vpop.f32.mrf.mxu0
  %v904 = vadd.f32 0.0, %v903
  %v905 = vpop.f32.mrf.mxu0
  %v906 = vpop.f32.mrf.mxu0
  %v907 = vadd.f32 0.0, %v906
  %v908 = vpop.f32.mrf.mxu0
  %909 = vmatprep.mubr.bf16.mxu0 0
  %910 = vmatmul.mubr.bf16.gmra.mxu0 %v396
  %v911 = vpop.f32.mrf.mxu0
  %v912 = vadd.f32 0.0, %v911
  %v913 = vpop.f32.mrf.mxu0
  %v914 = vpop.f32.mrf.mxu0
  %v915 = vadd.f32 0.0, %v914
  %v916 = vpop.f32.mrf.mxu0
  %917 = vmatprep.mubr.bf16.mxu0 0
  %918 = vmatmul.mubr.bf16.gmra.mxu0 %v397
  %v919 = vpop.f32.mrf.mxu0
  %v920 = vadd.f32 0.0, %v919
  %v921 = vpop.f32.mrf.mxu0
  %v922 = vpop.f32.mrf.mxu0
  %v923 = vadd.f32 0.0, %v922
  %v924 = vpop.f32.mrf.mxu0
  %925 = vmatprep.mubr.bf16.mxu0 0
  %926 = vmatmul.mubr.bf16.gmra.mxu0 %v398
  %v927 = vpop.f32.mrf.mxu0
  %v928 = vadd.f32 0.0, %v927
  %v929 = vpop.f32.mrf.mxu0
  %v930 = vpop.f32.mrf.mxu0
  %v931 = vadd.f32 0.0, %v930
  %v932 = vpop.f32.mrf.mxu0
  %933 = vmatprep.mubr.bf16.mxu0 0
  %934 = vmatmul.mubr.bf16.gmra.mxu0 %v399
  %v935 = vpop.f32.mrf.mxu0
  %v936 = vadd.f32 0.0, %v935
  %v937 = vpop.f32.mrf.mxu0
  %v938 = vpop.f32.mrf.mxu0
  %v939 = vadd.f32 0.0, %v938
  %v940 = vpop.f32.mrf.mxu0
  %941 = vmatprep.mubr.bf16.mxu0 0
  %942 = vmatmul.mubr.bf16.gmra.mxu0 %v400
  %v943 = vpop.f32.mrf.mxu0
  %v944 = vadd.f32 0.0, %v943
  %v945 = vpop.f32.mrf.mxu0
  %v946 = vpop.f32.mrf.mxu0
  %v947 = vadd.f32 0.0, %v946
  %v948 = vpop.f32.mrf.mxu0
  %949 = vdwg.mxu0
  %v950 = vmax.f32 %v536, %v640
  %v951 = vmax.f32 %v539, %v643
  %v952 = vmax.f32 %v544, %v648
  %v953 = vmax.f32 %v547, %v651
  %v954 = vmax.f32 %v552, %v656
  %v955 = vmax.f32 %v555, %v659
  %v956 = vmax.f32 %v560, %v664
  %v957 = vmax.f32 %v563, %v667
  %v958 = vmax.f32 %v568, %v672
  %v959 = vmax.f32 %v571, %v675
  %v960 = vmax.f32 %v576, %v680
  %v961 = vmax.f32 %v579, %v683
  %v962 = vmax.f32 %v584, %v688
  %v963 = vmax.f32 %v587, %v691
  %v964 = vmax.f32 %v592, %v696
  %v965 = vmax.f32 %v595, %v699
  %v966 = vmax.f32 %v600, %v704
  %v967 = vmax.f32 %v603, %v707
  %v968 = vmax.f32 %v608, %v712
  %v969 = vmax.f32 %v611, %v715
  %v970 = vmax.f32 %v616, %v720
  %v971 = vmax.f32 %v619, %v723
  %v972 = vmax.f32 %v624, %v728
  %v973 = vmax.f32 %v627, %v731
  %v974 = vmax.f32 %v632, %v736
  %v975 = vmax.f32 %v635, %v739
  %v976 = vmax.f32 %v744, %v848
  %v977 = vmax.f32 %v747, %v851
  %v978 = vmax.f32 %v752, %v856
  %v979 = vmax.f32 %v755, %v859
  %v980 = vmax.f32 %v760, %v864
  %v981 = vmax.f32 %v763, %v867
  %v982 = vmax.f32 %v768, %v872
  %v983 = vmax.f32 %v771, %v875
  %v984 = vmax.f32 %v776, %v880
  %v985 = vmax.f32 %v779, %v883
  %v986 = vmax.f32 %v784, %v888
  %v987 = vmax.f32 %v787, %v891
  %v988 = vmax.f32 %v792, %v896
  %v989 = vmax.f32 %v795, %v899
  %v990 = vmax.f32 %v800, %v904
  %v991 = vmax.f32 %v803, %v907
  %v992 = vmax.f32 %v808, %v912
  %v993 = vmax.f32 %v811, %v915
  %v994 = vmax.f32 %v816, %v920
  %v995 = vmax.f32 %v819, %v923
  %v996 = vmax.f32 %v824, %v928
  %v997 = vmax.f32 %v827, %v931
  %v998 = vmax.f32 %v832, %v936
  %v999 = vmax.f32 %v835, %v939
  %v1000 = vmax.f32 %v840, %v944
  %v1001 = vmax.f32 %v843, %v947
  %v1002 = vmax.f32 %v950, %v976
  %v1003 = vmax.f32 %v951, %v977
  %v1004 = vmax.f32 %v952, %v978
  %v1005 = vmax.f32 %v953, %v979
  %v1006 = vmax.f32 %v954, %v980
  %v1007 = vmax.f32 %v955, %v981
  %v1008 = vmax.f32 %v956, %v982
  %v1009 = vmax.f32 %v957, %v983
  %v1010 = vmax.f32 %v958, %v984
  %v1011 = vmax.f32 %v959, %v985
  %v1012 = vmax.f32 %v960, %v986
  %v1013 = vmax.f32 %v961, %v987
  %v1014 = vmax.f32 %v962, %v988
  %v1015 = vmax.f32 %v963, %v989
  %v1016 = vmax.f32 %v964, %v990
  %v1017 = vmax.f32 %v965, %v991
  %v1018 = vmax.f32 %v966, %v992
  %v1019 = vmax.f32 %v967, %v993
  %v1020 = vmax.f32 %v968, %v994
  %v1021 = vmax.f32 %v969, %v995
  %v1022 = vmax.f32 %v970, %v996
  %v1023 = vmax.f32 %v971, %v997
  %v1024 = vmax.f32 %v972, %v998
  %v1025 = vmax.f32 %v973, %v999
  %v1026 = vmax.f32 %v974, %v1000
  %v1027 = vmax.f32 %v975, %v1001
  %v1028 = vld [vmem:[%s2] sm:$0x1]
  %v1030 = vlaneseq
  %v1031 = vshrl.u32 %v1030, 7
  %v1032 = vsub.s32 0, %v1031
  %v1033 = vrot.slane %v1028, %v1032
  %v1035 = vadd.f32 %v1002, %v1033
  %v1036 = vadd.f32 %v1003, %v1033
  %v1037 = vadd.f32 %v1004, %v1033
  %v1038 = vadd.f32 %v1005, %v1033
  %v1039 = vadd.f32 %v1006, %v1033
  %v1040 = vadd.f32 %v1007, %v1033
  %v1041 = vadd.f32 %v1008, %v1033
  %v1042 = vadd.f32 %v1009, %v1033
  %v1043 = vadd.f32 %v1010, %v1033
  %v1044 = vadd.f32 %v1011, %v1033
  %v1045 = vadd.f32 %v1012, %v1033
  %v1046 = vadd.f32 %v1013, %v1033
  %v1047 = vadd.f32 %v1014, %v1033
  %v1048 = vadd.f32 %v1015, %v1033
  %v1049 = vadd.f32 %v1016, %v1033
  %v1050 = vadd.f32 %v1017, %v1033
  %v1051 = vadd.f32 %v1018, %v1033
  %v1052 = vadd.f32 %v1019, %v1033
  %v1053 = vadd.f32 %v1020, %v1033
  %v1054 = vadd.f32 %v1021, %v1033
  %v1055 = vadd.f32 %v1022, %v1033
  %v1056 = vadd.f32 %v1023, %v1033
  %v1057 = vadd.f32 %v1024, %v1033
  %v1058 = vadd.f32 %v1025, %v1033
  %v1059 = vadd.f32 %v1026, %v1033
  %v1060 = vadd.f32 %v1027, %v1033
  %v1061 = vmax.f32 %v1035, 0.0
  %v1062 = vmax.f32 %v1036, 0.0
  %v1063 = vmax.f32 %v1037, 0.0
  %v1064 = vmax.f32 %v1038, 0.0
  %v1065 = vmax.f32 %v1039, 0.0
  %v1066 = vmax.f32 %v1040, 0.0
  %v1067 = vmax.f32 %v1041, 0.0
  %v1068 = vmax.f32 %v1042, 0.0
  %v1069 = vmax.f32 %v1043, 0.0
  %v1070 = vmax.f32 %v1044, 0.0
  %v1071 = vmax.f32 %v1045, 0.0
  %v1072 = vmax.f32 %v1046, 0.0
  %v1073 = vmax.f32 %v1047, 0.0
  %v1074 = vmax.f32 %v1048, 0.0
  %v1075 = vmax.f32 %v1049, 0.0
  %v1076 = vmax.f32 %v1050, 0.0
  %v1077 = vmax.f32 %v1051, 0.0
  %v1078 = vmax.f32 %v1052, 0.0
  %v1079 = vmax.f32 %v1053, 0.0
  %v1080 = vmax.f32 %v1054, 0.0
  %v1081 = vmax.f32 %v1055, 0.0
  %v1082 = vmax.f32 %v1056, 0.0
  %v1083 = vmax.f32 %v1057, 0.0
  %v1084 = vmax.f32 %v1058, 0.0
  %v1085 = vmax.f32 %v1059, 0.0
  %v1086 = vmax.f32 %v1060, 0.0
  %v1087 = vld [vmem:[%s3] sm:$0x1]
  %v1089 = vlaneseq
  %v1090 = vshrl.u32 %v1089, 7
  %v1091 = vsub.s32 0, %v1090
  %v1092 = vrot.slane %v1087, %v1091
  %v1094 = vmul.f32 %v1061, %v1092
  %v1095 = vmul.f32 %v1062, %v1092
  %v1096 = vmul.f32 %v1063, %v1092
  %v1097 = vmul.f32 %v1064, %v1092
  %v1098 = vmul.f32 %v1065, %v1092
  %v1099 = vmul.f32 %v1066, %v1092
  %v1100 = vmul.f32 %v1067, %v1092
  %v1101 = vmul.f32 %v1068, %v1092
  %v1102 = vmul.f32 %v1069, %v1092
  %v1103 = vmul.f32 %v1070, %v1092
  %v1104 = vmul.f32 %v1071, %v1092
  %v1105 = vmul.f32 %v1072, %v1092
  %v1106 = vmul.f32 %v1073, %v1092
  %v1107 = vmul.f32 %v1074, %v1092
  %v1108 = vmul.f32 %v1075, %v1092
  %v1109 = vmul.f32 %v1076, %v1092
  %v1110 = vmul.f32 %v1077, %v1092
  %v1111 = vmul.f32 %v1078, %v1092
  %v1112 = vmul.f32 %v1079, %v1092
  %v1113 = vmul.f32 %v1080, %v1092
  %v1114 = vmul.f32 %v1081, %v1092
  %v1115 = vmul.f32 %v1082, %v1092
  %v1116 = vmul.f32 %v1083, %v1092
  %v1117 = vmul.f32 %v1084, %v1092
  %v1118 = vmul.f32 %v1085, %v1092
  %v1119 = vmul.f32 %v1086, %v1092
  %v1120 = vld [vmem:[%s4] sm:$0x1]
  %v1122 = vlaneseq
  %v1123 = vshrl.u32 %v1122, 7
  %v1124 = vsub.s32 0, %v1123
  %v1125 = vrot.slane %v1120, %v1124
  %v1127 = vadd.f32 %v1094, %v1125
  %v1128 = vadd.f32 %v1095, %v1125
  %v1129 = vadd.f32 %v1096, %v1125
  %v1130 = vadd.f32 %v1097, %v1125
  %v1131 = vadd.f32 %v1098, %v1125
  %v1132 = vadd.f32 %v1099, %v1125
  %v1133 = vadd.f32 %v1100, %v1125
  %v1134 = vadd.f32 %v1101, %v1125
  %v1135 = vadd.f32 %v1102, %v1125
  %v1136 = vadd.f32 %v1103, %v1125
  %v1137 = vadd.f32 %v1104, %v1125
  %v1138 = vadd.f32 %v1105, %v1125
  %v1139 = vadd.f32 %v1106, %v1125
  %v1140 = vadd.f32 %v1107, %v1125
  %v1141 = vadd.f32 %v1108, %v1125
  %v1142 = vadd.f32 %v1109, %v1125
  %v1143 = vadd.f32 %v1110, %v1125
  %v1144 = vadd.f32 %v1111, %v1125
  %v1145 = vadd.f32 %v1112, %v1125
  %v1146 = vadd.f32 %v1113, %v1125
  %v1147 = vadd.f32 %v1114, %v1125
  %v1148 = vadd.f32 %v1115, %v1125
  %v1149 = vadd.f32 %v1116, %v1125
  %v1150 = vadd.f32 %v1117, %v1125
  %v1151 = vadd.f32 %v1118, %v1125
  %v1152 = vadd.f32 %v1119, %v1125
  %v1153 = vpack.c.bf16 %v1128, %v1127
  %v1154 = vpack.c.bf16 %v1130, %v1129
  %v1155 = vpack.c.bf16 %v1132, %v1131
  %v1156 = vpack.c.bf16 %v1134, %v1133
  %v1157 = vpack.c.bf16 %v1136, %v1135
  %v1158 = vpack.c.bf16 %v1138, %v1137
  %v1159 = vpack.c.bf16 %v1140, %v1139
  %v1160 = vpack.c.bf16 %v1142, %v1141
  %v1161 = vpack.c.bf16 %v1144, %v1143
  %v1162 = vpack.c.bf16 %v1146, %v1145
  %v1163 = vpack.c.bf16 %v1148, %v1147
  %v1164 = vpack.c.bf16 %v1150, %v1149
  %v1165 = vpack.c.bf16 %v1152, %v1151
  %v1179 = vunpack.c.l.b16 %v1153
  %v1180 = vunpack.c.h.b16 %v1153
  %v1181 = vunpack.c.l.b16 %v1154
  %v1182 = vunpack.c.h.b16 %v1154
  %v1183 = vunpack.c.l.b16 %v1155
  %v1184 = vunpack.c.h.b16 %v1155
  %v1185 = vunpack.c.l.b16 %v1156
  %v1186 = vunpack.c.h.b16 %v1156
  %v1187 = vunpack.c.l.b16 %v1157
  %v1188 = vunpack.c.h.b16 %v1157
  %v1189 = vunpack.c.l.b16 %v1158
  %v1190 = vunpack.c.h.b16 %v1158
  %v1191 = vunpack.c.l.b16 %v1159
  %v1192 = vunpack.c.h.b16 %v1159
  %v1193 = vunpack.c.l.b16 %v1160
  %v1194 = vunpack.c.h.b16 %v1160
  %v1195 = vunpack.c.l.b16 %v1161
  %v1196 = vunpack.c.h.b16 %v1161
  %v1197 = vunpack.c.l.b16 %v1162
  %v1198 = vunpack.c.h.b16 %v1162
  %v1199 = vunpack.c.l.b16 %v1163
  %v1200 = vunpack.c.h.b16 %v1163
  %v1201 = vunpack.c.l.b16 %v1164
  %v1202 = vunpack.c.h.b16 %v1164
  %v1203 = vunpack.c.l.b16 %v1165
  %v1204 = vunpack.c.h.b16 %v1165
  %v1205 = vpack.c.b16 %v1179, %v1179
  %v1206 = vpack.c.b16 %v1180, %v1180
  %v1207 = vpack.c.b16 %v1181, %v1181
  %v1208 = vpack.c.b16 %v1182, %v1182
  %v1209 = vpack.c.b16 %v1183, %v1183
  %v1210 = vpack.c.b16 %v1184, %v1184
  %v1211 = vpack.c.b16 %v1185, %v1185
  %v1212 = vpack.c.b16 %v1186, %v1186
  %v1213 = vpack.c.b16 %v1187, %v1187
  %v1214 = vpack.c.b16 %v1188, %v1188
  %v1215 = vpack.c.b16 %v1189, %v1189
  %v1216 = vpack.c.b16 %v1190, %v1190
  %v1217 = vpack.c.b16 %v1191, %v1191
  %v1218 = vpack.c.b16 %v1192, %v1192
  %v1219 = vpack.c.b16 %v1193, %v1193
  %v1220 = vpack.c.b16 %v1194, %v1194
  %v1221 = vpack.c.b16 %v1195, %v1195
  %v1222 = vpack.c.b16 %v1196, %v1196
  %v1223 = vpack.c.b16 %v1197, %v1197
  %v1224 = vpack.c.b16 %v1198, %v1198
  %v1225 = vpack.c.b16 %v1199, %v1199
  %v1226 = vpack.c.b16 %v1200, %v1200
  %v1227 = vpack.c.b16 %v1201, %v1201
  %v1228 = vpack.c.b16 %v1202, %v1202
  %v1229 = vpack.c.b16 %v1203, %v1203
  %v1230 = vpack.c.b16 %v1204, %v1204
  %1257 = vst [vmem:[%s5] sm:$0xf] %v1205
  %1258 = vst [vmem:[%s5 + $0x4] sm:$0xf] %v1206
  %1259 = vst [vmem:[%s5 + $0x8] sm:$0xf] %v1207
  %1260 = vst [vmem:[%s5 + $0xc] sm:$0xf] %v1208
  %1261 = vst [vmem:[%s5 + $0x10] sm:$0xf] %v1209
  %1262 = vst [vmem:[%s5 + $0x14] sm:$0xf] %v1210
  %1263 = vst [vmem:[%s5 + $0x18] sm:$0xf] %v1211
  %1264 = vst [vmem:[%s5 + $0x1c] sm:$0xf] %v1212
  %1265 = vst [vmem:[%s5 + $0x20] sm:$0xf] %v1213
  %1266 = vst [vmem:[%s5 + $0x24] sm:$0xf] %v1214
  %1267 = vst [vmem:[%s5 + $0x28] sm:$0xf] %v1215
  %1268 = vst [vmem:[%s5 + $0x2c] sm:$0xf] %v1216
  %1269 = vst [vmem:[%s5 + $0x30] sm:$0xf] %v1217
  %1270 = vst [vmem:[%s5 + $0x34] sm:$0xf] %v1218
  %1271 = vst [vmem:[%s5 + $0x38] sm:$0xf] %v1219
  %1272 = vst [vmem:[%s5 + $0x3c] sm:$0xf] %v1220
  %1273 = vst [vmem:[%s5 + $0x40] sm:$0xf] %v1221
  %1274 = vst [vmem:[%s5 + $0x44] sm:$0xf] %v1222
  %1275 = vst [vmem:[%s5 + $0x48] sm:$0xf] %v1223
  %1276 = vst [vmem:[%s5 + $0x4c] sm:$0xf] %v1224
  %1277 = vst [vmem:[%s5 + $0x50] sm:$0xf] %v1225
  %1278 = vst [vmem:[%s5 + $0x54] sm:$0xf] %v1226
  %1279 = vst [vmem:[%s5 + $0x58] sm:$0xf] %v1227
  %1280 = vst [vmem:[%s5 + $0x5c] sm:$0xf] %v1228
  %1281 = vst [vmem:[%s5 + $0x60] sm:$0xf] %v1229
  %1282 = vst [vmem:[%s5 + $0x64] sm:$0xf] %v1230
  // Predicated region
  $region22: #{eegcnn_forward.3} parent=0 // pred_check
    _
  $region23: #{eegcnn_forward.3} parent=0 // pred_check_branch
    %1284 = sbr.rel (0) target = $region25
  $region24: #{eegcnn_forward.3} parent=0 // pred_region
    _
  $region25: #{eegcnn_forward.3} parent=0 // pred_fallthru
    _
  // Predicated region
  $region26: #{eegcnn_forward.3} parent=0 // pred_check
    _
  $region27: #{eegcnn_forward.3} parent=0 // pred_check_branch
    %1286 = sbr.rel (0) target = $region29
  $region28: #{eegcnn_forward.3} parent=0 // pred_region
    _
  $region29: #{eegcnn_forward.3} parent=0 // pred_fallthru
    _

// kernel: eegcnn_forward.4
$region0: #{eegcnn_forward.4}
  #allocation0 [shape = 'u32[]', space=smem, size = 0x4, offset = 0x4, fixed_abs, tag = 'smem constant byte address 0x4 - core index']
  #allocation1 [shape = 'u32[144,128]{1,0:T(1,128)}', space=vmem, size = 0x12000, scoped, tag = 'internal scratch']
  %s0 = inlined_call_operand.vmem [shape: bf16[4,48,384], index: 0, kind: input, shape index: {}]
  %s1 = inlined_call_operand.vmem [shape: bf16[384,128], index: 1, kind: input, shape index: {}]
  %s2 = inlined_call_operand.vmem [shape: f32[1,128], index: 2, kind: input, shape index: {}]
  %s3 = inlined_call_operand.vmem [shape: f32[1,128], index: 3, kind: input, shape index: {}]
  %s4 = inlined_call_operand.vmem [shape: f32[1,128], index: 4, kind: input, shape index: {}]
  %s5 = inlined_call_operand.vmem [shape: bf16[48,128], index: 5, kind: output, shape index: {}]
  %s6 = sld [smem:[#allocation0]]
  $region30: #{eegcnn_forward.4} parent=0
    _
  %s8 = ssub.s32 1, %s6
  %s9 = scalar_select 0, %s8, %s6
  // Predicated region
  $region2: #{eegcnn_forward.4} parent=0 // pred_check
    _
  $region3: #{eegcnn_forward.4} parent=0 // pred_check_branch
    %11 = sbr.rel (0) target = $region5
  $region4: #{eegcnn_forward.4} parent=0 // pred_region
    _
  $region5: #{eegcnn_forward.4} parent=0 // pred_fallthru
    _
  // Predicated region
  $region6: #{eegcnn_forward.4} parent=0 // pred_check
    _
  $region7: #{eegcnn_forward.4} parent=0 // pred_check_branch
    %13 = sbr.rel (0) target = $region9
  $region8: #{eegcnn_forward.4} parent=0 // pred_region
    _
  $region9: #{eegcnn_forward.4} parent=0 // pred_fallthru
    _
  // Predicated region
  $region10: #{eegcnn_forward.4} parent=0 // pred_check
    _
  $region11: #{eegcnn_forward.4} parent=0 // pred_check_branch
    %15 = sbr.rel (0) target = $region13
  $region12: #{eegcnn_forward.4} parent=0 // pred_region
    _
  $region13: #{eegcnn_forward.4} parent=0 // pred_fallthru
    _
  // Predicated region
  $region14: #{eegcnn_forward.4} parent=0 // pred_check
    _
  $region15: #{eegcnn_forward.4} parent=0 // pred_check_branch
    %17 = sbr.rel (0) target = $region17
  $region16: #{eegcnn_forward.4} parent=0 // pred_region
    _
  $region17: #{eegcnn_forward.4} parent=0 // pred_fallthru
    _
  // Predicated region
  $region18: #{eegcnn_forward.4} parent=0 // pred_check
    _
  $region19: #{eegcnn_forward.4} parent=0 // pred_check_branch
    %19 = sbr.rel (0) target = $region21
  $region20: #{eegcnn_forward.4} parent=0 // pred_region
    _
  $region21: #{eegcnn_forward.4} parent=0 // pred_fallthru
    _
  %v21 = vld [vmem:[%s0] sm:$0xff]
  %v22 = vld [vmem:[%s0 + $0x8] sm:$0xf]
  %v23 = vld [vmem:[%s0 + $0xc] sm:$0xff]
  %v24 = vld [vmem:[%s0 + $0x14] sm:$0xf]
  %v25 = vld [vmem:[%s0 + $0x18] sm:$0xff]
  %v26 = vld [vmem:[%s0 + $0x20] sm:$0xf]
  %v27 = vld [vmem:[%s0 + $0x24] sm:$0xff]
  %v28 = vld [vmem:[%s0 + $0x2c] sm:$0xf]
  %v29 = vld [vmem:[%s0 + $0x30] sm:$0xff]
  %v30 = vld [vmem:[%s0 + $0x38] sm:$0xf]
  %v31 = vld [vmem:[%s0 + $0x3c] sm:$0xff]
  %v32 = vld [vmem:[%s0 + $0x44] sm:$0xf]
  %v33 = vld [vmem:[%s0 + $0x48] sm:$0xff]
  %v34 = vld [vmem:[%s0 + $0x50] sm:$0xf]
  %v35 = vld [vmem:[%s0 + $0x54] sm:$0xff]
  %v36 = vld [vmem:[%s0 + $0x5c] sm:$0xf]
  %v37 = vld [vmem:[%s0 + $0x60] sm:$0xff]
  %v38 = vld [vmem:[%s0 + $0x68] sm:$0xf]
  %v39 = vld [vmem:[%s0 + $0x6c] sm:$0xff]
  %v40 = vld [vmem:[%s0 + $0x74] sm:$0xf]
  %v41 = vld [vmem:[%s0 + $0x78] sm:$0xff]
  %v42 = vld [vmem:[%s0 + $0x80] sm:$0xf]
  %v43 = vld [vmem:[%s0 + $0x84] sm:$0xff]
  %v44 = vld [vmem:[%s0 + $0x8c] sm:$0xf]
  %v45 = vld [vmem:[%s0 + $0x90] sm:$0xff]
  %v46 = vld [vmem:[%s0 + $0x98] sm:$0xf]
  %v47 = vld [vmem:[%s0 + $0x9c] sm:$0xff]
  %v48 = vld [vmem:[%s0 + $0xa4] sm:$0xf]
  %v49 = vld [vmem:[%s0 + $0xa8] sm:$0xff]
  %v50 = vld [vmem:[%s0 + $0xb0] sm:$0xf]
  %v51 = vld [vmem:[%s0 + $0xb4] sm:$0xff]
  %v52 = vld [vmem:[%s0 + $0xbc] sm:$0xf]
  %v53 = vld [vmem:[%s0 + $0xc0] sm:$0xff]
  %v54 = vld [vmem:[%s0 + $0xc8] sm:$0xf]
  %v55 = vld [vmem:[%s0 + $0xcc] sm:$0xff]
  %v56 = vld [vmem:[%s0 + $0xd4] sm:$0xf]
  %v57 = vld [vmem:[%s0 + $0xd8] sm:$0xff]
  %v58 = vld [vmem:[%s0 + $0xe0] sm:$0xf]
  %v59 = vld [vmem:[%s0 + $0xe4] sm:$0xff]
  %v60 = vld [vmem:[%s0 + $0xec] sm:$0xf]
  %v61 = vld [vmem:[%s0 + $0xf0] sm:$0xff]
  %v62 = vld [vmem:[%s0 + $0xf8] sm:$0xf]
  %v63 = vld [vmem:[%s0 + $0xfc] sm:$0xff]
  %v64 = vld [vmem:[%s0 + $0x104] sm:$0xf]
  %v65 = vld [vmem:[%s0 + $0x108] sm:$0xff]
  %v66 = vld [vmem:[%s0 + $0x110] sm:$0xf]
  %v67 = vld [vmem:[%s0 + $0x114] sm:$0xff]
  %v68 = vld [vmem:[%s0 + $0x11c] sm:$0xf]
  %v69 = vld [vmem:[%s1] sm:$0xf]
  %v70 = vld [vmem:[%s1 + $0x4] sm:$0xf]
  %v71 = vld [vmem:[%s1 + $0x8] sm:$0xf]
  %v72 = vld [vmem:[%s1 + $0xc] sm:$0xf]
  %v73 = vld [vmem:[%s1 + $0x10] sm:$0xf]
  %v74 = vld [vmem:[%s1 + $0x14] sm:$0xf]
  %v75 = vld [vmem:[%s1 + $0x18] sm:$0xf]
  %v76 = vld [vmem:[%s1 + $0x1c] sm:$0xf]
  %v77 = vld [vmem:[%s1 + $0x20] sm:$0xf]
  %v78 = vld [vmem:[%s1 + $0x24] sm:$0xf]
  %v79 = vld [vmem:[%s1 + $0x28] sm:$0xf]
  %v80 = vld [vmem:[%s1 + $0x2c] sm:$0xf]
  %v81 = vld [vmem:[%s1 + $0x30] sm:$0xf]
  %v82 = vld [vmem:[%s1 + $0x34] sm:$0xf]
  %v83 = vld [vmem:[%s1 + $0x38] sm:$0xf]
  %v84 = vld [vmem:[%s1 + $0x3c] sm:$0xf]
  %v85 = vld [vmem:[%s1 + $0x40] sm:$0xf]
  %v86 = vld [vmem:[%s1 + $0x44] sm:$0xf]
  %v87 = vld [vmem:[%s1 + $0x48] sm:$0xf]
  %v88 = vld [vmem:[%s1 + $0x4c] sm:$0xf]
  %v89 = vld [vmem:[%s1 + $0x50] sm:$0xf]
  %v90 = vld [vmem:[%s1 + $0x54] sm:$0xf]
  %v91 = vld [vmem:[%s1 + $0x58] sm:$0xf]
  %v92 = vld [vmem:[%s1 + $0x5c] sm:$0xf]
  %v93 = vld [vmem:[%s1 + $0x60] sm:$0xf]
  %v94 = vld [vmem:[%s1 + $0x64] sm:$0xf]
  %v95 = vld [vmem:[%s1 + $0x68] sm:$0xf]
  %v96 = vld [vmem:[%s1 + $0x6c] sm:$0xf]
  %v97 = vld [vmem:[%s1 + $0x70] sm:$0xf]
  %v98 = vld [vmem:[%s1 + $0x74] sm:$0xf]
  %v99 = vld [vmem:[%s1 + $0x78] sm:$0xf]
  %v100 = vld [vmem:[%s1 + $0x7c] sm:$0xf]
  %v101 = vld [vmem:[%s1 + $0x80] sm:$0xf]
  %v102 = vld [vmem:[%s1 + $0x84] sm:$0xf]
  %v103 = vld [vmem:[%s1 + $0x88] sm:$0xf]
  %v104 = vld [vmem:[%s1 + $0x8c] sm:$0xf]
  %v105 = vld [vmem:[%s1 + $0x90] sm:$0xf]
  %v106 = vld [vmem:[%s1 + $0x94] sm:$0xf]
  %v107 = vld [vmem:[%s1 + $0x98] sm:$0xf]
  %v108 = vld [vmem:[%s1 + $0x9c] sm:$0xf]
  %v109 = vld [vmem:[%s1 + $0xa0] sm:$0xf]
  %v110 = vld [vmem:[%s1 + $0xa4] sm:$0xf]
  %v111 = vld [vmem:[%s1 + $0xa8] sm:$0xf]
  %v112 = vld [vmem:[%s1 + $0xac] sm:$0xf]
  %v113 = vld [vmem:[%s1 + $0xb0] sm:$0xf]
  %v114 = vld [vmem:[%s1 + $0xb4] sm:$0xf]
  %v115 = vld [vmem:[%s1 + $0xb8] sm:$0xf]
  %v116 = vld [vmem:[%s1 + $0xbc] sm:$0xf]
  %v165 = vunpack.c.l.b16 %v21
  %v166 = vunpack.c.h.b16 %v21
  %v167 = vunpack.c.l.b16 %v22
  %v168 = vunpack.c.l.b16 %v23
  %v169 = vunpack.c.h.b16 %v23
  %v170 = vunpack.c.l.b16 %v24
  %v171 = vunpack.c.l.b16 %v25
  %v172 = vunpack.c.h.b16 %v25
  %v173 = vunpack.c.l.b16 %v26
  %v174 = vunpack.c.l.b16 %v27
  %v175 = vunpack.c.h.b16 %v27
  %v176 = vunpack.c.l.b16 %v28
  %v177 = vunpack.c.l.b16 %v29
  %v178 = vunpack.c.h.b16 %v29
  %v179 = vunpack.c.l.b16 %v30
  %v180 = vunpack.c.l.b16 %v31
  %v181 = vunpack.c.h.b16 %v31
  %v182 = vunpack.c.l.b16 %v32
  %v183 = vunpack.c.l.b16 %v33
  %v184 = vunpack.c.h.b16 %v33
  %v185 = vunpack.c.l.b16 %v34
  %v186 = vunpack.c.l.b16 %v35
  %v187 = vunpack.c.h.b16 %v35
  %v188 = vunpack.c.l.b16 %v36
  %v189 = vunpack.c.l.b16 %v37
  %v190 = vunpack.c.h.b16 %v37
  %v191 = vunpack.c.l.b16 %v38
  %v192 = vunpack.c.l.b16 %v39
  %v193 = vunpack.c.h.b16 %v39
  %v194 = vunpack.c.l.b16 %v40
  %v195 = vunpack.c.l.b16 %v41
  %v196 = vunpack.c.h.b16 %v41
  %v197 = vunpack.c.l.b16 %v42
  %v198 = vunpack.c.l.b16 %v43
  %v199 = vunpack.c.h.b16 %v43
  %v200 = vunpack.c.l.b16 %v44
  %v201 = vunpack.c.l.b16 %v45
  %v202 = vunpack.c.h.b16 %v45
  %v203 = vunpack.c.l.b16 %v46
  %v204 = vunpack.c.l.b16 %v47
  %v205 = vunpack.c.h.b16 %v47
  %v206 = vunpack.c.l.b16 %v48
  %v207 = vunpack.c.l.b16 %v49
  %v208 = vunpack.c.h.b16 %v49
  %v209 = vunpack.c.l.b16 %v50
  %v210 = vunpack.c.l.b16 %v51
  %v211 = vunpack.c.h.b16 %v51
  %v212 = vunpack.c.l.b16 %v52
  %v213 = vunpack.c.l.b16 %v53
  %v214 = vunpack.c.h.b16 %v53
  %v215 = vunpack.c.l.b16 %v54
  %v216 = vunpack.c.l.b16 %v55
  %v217 = vunpack.c.h.b16 %v55
  %v218 = vunpack.c.l.b16 %v56
  %v219 = vunpack.c.l.b16 %v57
  %v220 = vunpack.c.h.b16 %v57
  %v221 = vunpack.c.l.b16 %v58
  %v222 = vunpack.c.l.b16 %v59
  %v223 = vunpack.c.h.b16 %v59
  %v224 = vunpack.c.l.b16 %v60
  %v225 = vunpack.c.l.b16 %v61
  %v226 = vunpack.c.h.b16 %v61
  %v227 = vunpack.c.l.b16 %v62
  %v228 = vunpack.c.l.b16 %v63
  %v229 = vunpack.c.h.b16 %v63
  %v230 = vunpack.c.l.b16 %v64
  %v231 = vunpack.c.l.b16 %v65
  %v232 = vunpack.c.h.b16 %v65
  %v233 = vunpack.c.l.b16 %v66
  %v234 = vunpack.c.l.b16 %v67
  %v235 = vunpack.c.h.b16 %v67
  %v236 = vunpack.c.l.b16 %v68
  %v237 = vpack.c.b16 %v168, %v165
  %v238 = vpack.c.b16 %v169, %v166
  %v239 = vpack.c.b16 %v170, %v167
  %v240 = vpack.c.b16 %v174, %v171
  %v241 = vpack.c.b16 %v175, %v172
  %v242 = vpack.c.b16 %v176, %v173
  %v243 = vpack.c.b16 %v180, %v177
  %v244 = vpack.c.b16 %v181, %v178
  %v245 = vpack.c.b16 %v182, %v179
  %v246 = vpack.c.b16 %v186, %v183
  %v247 = vpack.c.b16 %v187, %v184
  %v248 = vpack.c.b16 %v188, %v185
  %v249 = vpack.c.b16 %v192, %v189
  %v250 = vpack.c.b16 %v193, %v190
  %v251 = vpack.c.b16 %v194, %v191
  %v252 = vpack.c.b16 %v198, %v195
  %v253 = vpack.c.b16 %v199, %v196
  %v254 = vpack.c.b16 %v200, %v197
  %v255 = vpack.c.b16 %v204, %v201
  %v256 = vpack.c.b16 %v205, %v202
  %v257 = vpack.c.b16 %v206, %v203
  %v258 = vpack.c.b16 %v210, %v207
  %v259 = vpack.c.b16 %v211, %v208
  %v260 = vpack.c.b16 %v212, %v209
  %v261 = vpack.c.b16 %v216, %v213
  %v262 = vpack.c.b16 %v217, %v214
  %v263 = vpack.c.b16 %v218, %v215
  %v264 = vpack.c.b16 %v222, %v219
  %v265 = vpack.c.b16 %v223, %v220
  %v266 = vpack.c.b16 %v224, %v221
  %v267 = vpack.c.b16 %v228, %v225
  %v268 = vpack.c.b16 %v229, %v226
  %v269 = vpack.c.b16 %v230, %v227
  %v270 = vpack.c.b16 %v234, %v231
  %v271 = vpack.c.b16 %v235, %v232
  %v272 = vpack.c.b16 %v236, %v233
  %v357 = vunpack.c.l.b16 %v69
  %v358 = vunpack.c.l.b16 %v70
  %v359 = vunpack.c.l.b16 %v71
  %v360 = vunpack.c.l.b16 %v72
  %v361 = vunpack.c.l.b16 %v73
  %v362 = vunpack.c.l.b16 %v74
  %v363 = vunpack.c.l.b16 %v75
  %v364 = vunpack.c.l.b16 %v76
  %v365 = vunpack.c.l.b16 %v77
  %v366 = vunpack.c.l.b16 %v78
  %v367 = vunpack.c.l.b16 %v79
  %v368 = vunpack.c.l.b16 %v80
  %v369 = vunpack.c.l.b16 %v81
  %v370 = vunpack.c.l.b16 %v82
  %v371 = vunpack.c.l.b16 %v83
  %v372 = vunpack.c.l.b16 %v84
  %v373 = vunpack.c.l.b16 %v85
  %v374 = vunpack.c.l.b16 %v86
  %v375 = vunpack.c.l.b16 %v87
  %v376 = vunpack.c.l.b16 %v88
  %v377 = vunpack.c.l.b16 %v89
  %v378 = vunpack.c.l.b16 %v90
  %v379 = vunpack.c.l.b16 %v91
  %v380 = vunpack.c.l.b16 %v92
  %v381 = vunpack.c.l.b16 %v93
  %v382 = vunpack.c.l.b16 %v94
  %v383 = vunpack.c.l.b16 %v95
  %v384 = vunpack.c.l.b16 %v96
  %v385 = vunpack.c.l.b16 %v97
  %v386 = vunpack.c.l.b16 %v98
  %v387 = vunpack.c.l.b16 %v99
  %v388 = vunpack.c.l.b16 %v100
  %v389 = vunpack.c.l.b16 %v101
  %v390 = vunpack.c.l.b16 %v102
  %v391 = vunpack.c.l.b16 %v103
  %v392 = vunpack.c.l.b16 %v104
  %v393 = vunpack.c.l.b16 %v105
  %v394 = vunpack.c.l.b16 %v106
  %v395 = vunpack.c.l.b16 %v107
  %v396 = vunpack.c.l.b16 %v108
  %v397 = vunpack.c.l.b16 %v109
  %v398 = vunpack.c.l.b16 %v110
  %v399 = vunpack.c.l.b16 %v111
  %v400 = vunpack.c.l.b16 %v112
  %v401 = vunpack.c.l.b16 %v113
  %v402 = vunpack.c.l.b16 %v114
  %v403 = vunpack.c.l.b16 %v115
  %v404 = vunpack.c.l.b16 %v116
  %v405 = vpack.c.b16 %v358, %v357
  %v406 = vpack.c.b16 %v360, %v359
  %v407 = vpack.c.b16 %v362, %v361
  %v408 = vpack.c.b16 %v364, %v363
  %v409 = vpack.c.b16 %v366, %v365
  %v410 = vpack.c.b16 %v368, %v367
  %v411 = vpack.c.b16 %v370, %v369
  %v412 = vpack.c.b16 %v372, %v371
  %v413 = vpack.c.b16 %v374, %v373
  %v414 = vpack.c.b16 %v376, %v375
  %v415 = vpack.c.b16 %v378, %v377
  %v416 = vpack.c.b16 %v380, %v379
  %v417 = vpack.c.b16 %v382, %v381
  %v418 = vpack.c.b16 %v384, %v383
  %v419 = vpack.c.b16 %v386, %v385
  %v420 = vpack.c.b16 %v388, %v387
  %v421 = vpack.c.b16 %v390, %v389
  %v422 = vpack.c.b16 %v392, %v391
  %v423 = vpack.c.b16 %v394, %v393
  %v424 = vpack.c.b16 %v396, %v395
  %v425 = vpack.c.b16 %v398, %v397
  %v426 = vpack.c.b16 %v400, %v399
  %v427 = vpack.c.b16 %v402, %v401
  %v428 = vpack.c.b16 %v404, %v403
  %453 = vmatprep.subr.bf16.mxu0 0
  %454 = vmatpush1.bf16.msra.mxu0 %v412
  %455 = vmatprep.subr.bf16.mxu0 0
  %456 = vmatpush1.bf16.msra.mxu0 %v411
  %457 = vmatprep.subr.bf16.mxu0 0
  %458 = vmatpush1.bf16.msra.mxu0 %v410
  %459 = vmatprep.subr.bf16.mxu0 0
  %460 = vmatpush1.bf16.msra.mxu0 %v409
  %461 = vmatprep.subr.bf16.mxu0 0
  %462 = vmatpush1.bf16.msra.mxu0 %v408
  %463 = vmatprep.subr.bf16.mxu0 0
  %464 = vmatpush1.bf16.msra.mxu0 %v407
  %465 = vmatprep.subr.bf16.mxu0 0
  %466 = vmatpush1.bf16.msra.mxu0 %v406
  %467 = vmatprep.subr.bf16.mxu0 0
  %468 = vmatpush1.bf16.msra.mxu0 %v405
  %469 = vmatprep.subr.bf16.mxu0 0
  %470 = vmatpush2.bf16.msra.mxu0 %v420
  %471 = vmatprep.subr.bf16.mxu0 0
  %472 = vmatpush2.bf16.msra.mxu0 %v419
  %473 = vmatprep.subr.bf16.mxu0 0
  %474 = vmatpush2.bf16.msra.mxu0 %v418
  %475 = vmatprep.subr.bf16.mxu0 0
  %476 = vmatpush2.bf16.msra.mxu0 %v417
  %477 = vmatprep.subr.bf16.mxu0 0
  %478 = vmatpush2.bf16.msra.mxu0 %v416
  %479 = vmatprep.subr.bf16.mxu0 0
  %480 = vmatpush2.bf16.msra.mxu0 %v415
  %481 = vmatprep.subr.bf16.mxu0 0
  %482 = vmatpush2.bf16.msra.mxu0 %v414
  %483 = vmatprep.subr.bf16.mxu0 0
  %484 = vmatpush2.bf16.msra.mxu0 %v413
  %485 = vmatprep.mubr.bf16.mxu0 %v238
  %486 = vmatmul.mubr.bf16.gmra.mxu0 %v237
  %v487 = vpop.f32.mrf.mxu0
  %v488 = vadd.f32 0.0, %v487
  %v489 = vpop.f32.mrf.mxu0
  %v490 = vpop.f32.mrf.mxu0
  %v491 = vadd.f32 0.0, %v490
  %v492 = vpop.f32.mrf.mxu0
  %493 = vmatprep.mubr.bf16.mxu0 %v241
  %494 = vmatmul.mubr.bf16.gmra.mxu0 %v240
  %v495 = vpop.f32.mrf.mxu0
  %v496 = vadd.f32 0.0, %v495
  %v497 = vpop.f32.mrf.mxu0
  %v498 = vpop.f32.mrf.mxu0
  %v499 = vadd.f32 0.0, %v498
  %v500 = vpop.f32.mrf.mxu0
  %501 = vmatprep.mubr.bf16.mxu0 %v244
  %502 = vmatmul.mubr.bf16.gmra.mxu0 %v243
  %v503 = vpop.f32.mrf.mxu0
  %v504 = vadd.f32 0.0, %v503
  %v505 = vpop.f32.mrf.mxu0
  %v506 = vpop.f32.mrf.mxu0
  %v507 = vadd.f32 0.0, %v506
  %v508 = vpop.f32.mrf.mxu0
  %509 = vmatprep.mubr.bf16.mxu0 %v247
  %510 = vmatmul.mubr.bf16.gmra.mxu0 %v246
  %v511 = vpop.f32.mrf.mxu0
  %v512 = vadd.f32 0.0, %v511
  %v513 = vpop.f32.mrf.mxu0
  %v514 = vpop.f32.mrf.mxu0
  %v515 = vadd.f32 0.0, %v514
  %v516 = vpop.f32.mrf.mxu0
  %517 = vmatprep.mubr.bf16.mxu0 %v250
  %518 = vmatmul.mubr.bf16.gmra.mxu0 %v249
  %v519 = vpop.f32.mrf.mxu0
  %v520 = vadd.f32 0.0, %v519
  %v521 = vpop.f32.mrf.mxu0
  %v522 = vpop.f32.mrf.mxu0
  %v523 = vadd.f32 0.0, %v522
  %v524 = vpop.f32.mrf.mxu0
  %525 = vmatprep.mubr.bf16.mxu0 %v253
  %526 = vmatmul.mubr.bf16.gmra.mxu0 %v252
  %v527 = vpop.f32.mrf.mxu0
  %v528 = vadd.f32 0.0, %v527
  %v529 = vpop.f32.mrf.mxu0
  %v530 = vpop.f32.mrf.mxu0
  %v531 = vadd.f32 0.0, %v530
  %v532 = vpop.f32.mrf.mxu0
  %533 = vmatprep.mubr.bf16.mxu0 %v256
  %534 = vmatmul.mubr.bf16.gmra.mxu0 %v255
  %v535 = vpop.f32.mrf.mxu0
  %v536 = vadd.f32 0.0, %v535
  %v537 = vpop.f32.mrf.mxu0
  %v538 = vpop.f32.mrf.mxu0
  %v539 = vadd.f32 0.0, %v538
  %v540 = vpop.f32.mrf.mxu0
  %541 = vmatprep.mubr.bf16.mxu0 %v259
  %542 = vmatmul.mubr.bf16.gmra.mxu0 %v258
  %v543 = vpop.f32.mrf.mxu0
  %v544 = vadd.f32 0.0, %v543
  %v545 = vpop.f32.mrf.mxu0
  %v546 = vpop.f32.mrf.mxu0
  %v547 = vadd.f32 0.0, %v546
  %v548 = vpop.f32.mrf.mxu0
  %549 = vmatprep.mubr.bf16.mxu0 %v262
  %550 = vmatmul.mubr.bf16.gmra.mxu0 %v261
  %v551 = vpop.f32.mrf.mxu0
  %v552 = vadd.f32 0.0, %v551
  %v553 = vpop.f32.mrf.mxu0
  %v554 = vpop.f32.mrf.mxu0
  %v555 = vadd.f32 0.0, %v554
  %v556 = vpop.f32.mrf.mxu0
  %557 = vmatprep.mubr.bf16.mxu0 %v265
  %558 = vmatmul.mubr.bf16.gmra.mxu0 %v264
  %v559 = vpop.f32.mrf.mxu0
  %v560 = vadd.f32 0.0, %v559
  %v561 = vpop.f32.mrf.mxu0
  %v562 = vpop.f32.mrf.mxu0
  %v563 = vadd.f32 0.0, %v562
  %v564 = vpop.f32.mrf.mxu0
  %565 = vmatprep.mubr.bf16.mxu0 %v268
  %566 = vmatmul.mubr.bf16.gmra.mxu0 %v267
  %v567 = vpop.f32.mrf.mxu0
  %v568 = vadd.f32 0.0, %v567
  %v569 = vpop.f32.mrf.mxu0
  %v570 = vpop.f32.mrf.mxu0
  %v571 = vadd.f32 0.0, %v570
  %v572 = vpop.f32.mrf.mxu0
  %573 = vmatprep.mubr.bf16.mxu0 %v271
  %574 = vmatmul.mubr.bf16.gmra.mxu0 %v270
  %v575 = vpop.f32.mrf.mxu0
  %v576 = vadd.f32 0.0, %v575
  %v577 = vpop.f32.mrf.mxu0
  %v578 = vpop.f32.mrf.mxu0
  %v579 = vadd.f32 0.0, %v578
  %v580 = vpop.f32.mrf.mxu0
  %581 = vdwg.mxu0
  %582 = vmatprep.subr.bf16.mxu0 0
  %583 = vmatpush1.bf16.msra.mxu0 %v428
  %584 = vmatprep.subr.bf16.mxu0 0
  %585 = vmatpush1.bf16.msra.mxu0 %v427
  %586 = vmatprep.subr.bf16.mxu0 0
  %587 = vmatpush1.bf16.msra.mxu0 %v426
  %588 = vmatprep.subr.bf16.mxu0 0
  %589 = vmatpush1.bf16.msra.mxu0 %v425
  %590 = vmatprep.subr.bf16.mxu0 0
  %591 = vmatpush1.bf16.msra.mxu0 %v424
  %592 = vmatprep.subr.bf16.mxu0 0
  %593 = vmatpush1.bf16.msra.mxu0 %v423
  %594 = vmatprep.subr.bf16.mxu0 0
  %595 = vmatpush1.bf16.msra.mxu0 %v422
  %596 = vmatprep.subr.bf16.mxu0 0
  %597 = vmatpush1.bf16.msra.mxu0 %v421
  %598 = vmatprep.subr.bf16.mxu0 0
  %599 = vmatpush2.bf16.msra.mxu0 0
  %600 = vmatprep.subr.bf16.mxu0 0
  %601 = vmatpush2.bf16.msra.mxu0 0
  %602 = vmatprep.subr.bf16.mxu0 0
  %603 = vmatpush2.bf16.msra.mxu0 0
  %604 = vmatprep.subr.bf16.mxu0 0
  %605 = vmatpush2.bf16.msra.mxu0 0
  %606 = vmatprep.subr.bf16.mxu0 0
  %607 = vmatpush2.bf16.msra.mxu0 0
  %608 = vmatprep.subr.bf16.mxu0 0
  %609 = vmatpush2.bf16.msra.mxu0 0
  %610 = vmatprep.subr.bf16.mxu0 0
  %611 = vmatpush2.bf16.msra.mxu0 0
  %612 = vmatprep.subr.bf16.mxu0 0
  %613 = vmatpush2.bf16.msra.mxu0 0
  %614 = vmatprep.mubr.bf16.mxu0 0
  %615 = vmatmul.mubr.bf16.gmra.mxu0 %v239
  %v616 = vpop.f32.mrf.mxu0
  %v617 = vadd.f32 %v488, %v616
  %v618 = vpop.f32.mrf.mxu0
  %v619 = vpop.f32.mrf.mxu0
  %v620 = vadd.f32 %v491, %v619
  %v621 = vpop.f32.mrf.mxu0
  %622 = vmatprep.mubr.bf16.mxu0 0
  %623 = vmatmul.mubr.bf16.gmra.mxu0 %v242
  %v624 = vpop.f32.mrf.mxu0
  %v625 = vadd.f32 %v496, %v624
  %v626 = vpop.f32.mrf.mxu0
  %v627 = vpop.f32.mrf.mxu0
  %v628 = vadd.f32 %v499, %v627
  %v629 = vpop.f32.mrf.mxu0
  %630 = vmatprep.mubr.bf16.mxu0 0
  %631 = vmatmul.mubr.bf16.gmra.mxu0 %v245
  %v632 = vpop.f32.mrf.mxu0
  %v633 = vadd.f32 %v504, %v632
  %v634 = vpop.f32.mrf.mxu0
  %v635 = vpop.f32.mrf.mxu0
  %v636 = vadd.f32 %v507, %v635
  %v637 = vpop.f32.mrf.mxu0
  %638 = vmatprep.mubr.bf16.mxu0 0
  %639 = vmatmul.mubr.bf16.gmra.mxu0 %v248
  %v640 = vpop.f32.mrf.mxu0
  %v641 = vadd.f32 %v512, %v640
  %v642 = vpop.f32.mrf.mxu0
  %v643 = vpop.f32.mrf.mxu0
  %v644 = vadd.f32 %v515, %v643
  %v645 = vpop.f32.mrf.mxu0
  %646 = vmatprep.mubr.bf16.mxu0 0
  %647 = vmatmul.mubr.bf16.gmra.mxu0 %v251
  %v648 = vpop.f32.mrf.mxu0
  %v649 = vadd.f32 %v520, %v648
  %v650 = vpop.f32.mrf.mxu0
  %v651 = vpop.f32.mrf.mxu0
  %v652 = vadd.f32 %v523, %v651
  %v653 = vpop.f32.mrf.mxu0
  %654 = vmatprep.mubr.bf16.mxu0 0
  %655 = vmatmul.mubr.bf16.gmra.mxu0 %v254
  %v656 = vpop.f32.mrf.mxu0
  %v657 = vadd.f32 %v528, %v656
  %v658 = vpop.f32.mrf.mxu0
  %v659 = vpop.f32.mrf.mxu0
  %v660 = vadd.f32 %v531, %v659
  %v661 = vpop.f32.mrf.mxu0
  %662 = vmatprep.mubr.bf16.mxu0 0
  %663 = vmatmul.mubr.bf16.gmra.mxu0 %v257
  %v664 = vpop.f32.mrf.mxu0
  %v665 = vadd.f32 %v536, %v664
  %v666 = vpop.f32.mrf.mxu0
  %v667 = vpop.f32.mrf.mxu0
  %v668 = vadd.f32 %v539, %v667
  %v669 = vpop.f32.mrf.mxu0
  %670 = vmatprep.mubr.bf16.mxu0 0
  %671 = vmatmul.mubr.bf16.gmra.mxu0 %v260
  %v672 = vpop.f32.mrf.mxu0
  %v673 = vadd.f32 %v544, %v672
  %v674 = vpop.f32.mrf.mxu0
  %v675 = vpop.f32.mrf.mxu0
  %v676 = vadd.f32 %v547, %v675
  %v677 = vpop.f32.mrf.mxu0
  %678 = vmatprep.mubr.bf16.mxu0 0
  %679 = vmatmul.mubr.bf16.gmra.mxu0 %v263
  %v680 = vpop.f32.mrf.mxu0
  %v681 = vadd.f32 %v552, %v680
  %v682 = vpop.f32.mrf.mxu0
  %v683 = vpop.f32.mrf.mxu0
  %v684 = vadd.f32 %v555, %v683
  %v685 = vpop.f32.mrf.mxu0
  %686 = vmatprep.mubr.bf16.mxu0 0
  %687 = vmatmul.mubr.bf16.gmra.mxu0 %v266
  %v688 = vpop.f32.mrf.mxu0
  %v689 = vadd.f32 %v560, %v688
  %v690 = vpop.f32.mrf.mxu0
  %v691 = vpop.f32.mrf.mxu0
  %v692 = vadd.f32 %v563, %v691
  %v693 = vpop.f32.mrf.mxu0
  %694 = vmatprep.mubr.bf16.mxu0 0
  %695 = vmatmul.mubr.bf16.gmra.mxu0 %v269
  %v696 = vpop.f32.mrf.mxu0
  %v697 = vadd.f32 %v568, %v696
  %v698 = vpop.f32.mrf.mxu0
  %v699 = vpop.f32.mrf.mxu0
  %v700 = vadd.f32 %v571, %v699
  %v701 = vpop.f32.mrf.mxu0
  %702 = vmatprep.mubr.bf16.mxu0 0
  %703 = vmatmul.mubr.bf16.gmra.mxu0 %v272
  %v704 = vpop.f32.mrf.mxu0
  %v705 = vadd.f32 %v576, %v704
  %v706 = vpop.f32.mrf.mxu0
  %v707 = vpop.f32.mrf.mxu0
  %v708 = vadd.f32 %v579, %v707
  %v709 = vpop.f32.mrf.mxu0
  %710 = vdwg.mxu0
  %v711 = vmax.f32 %v617, %v641
  %v712 = vmax.f32 %v620, %v644
  %v713 = vmax.f32 %v625, %v649
  %v714 = vmax.f32 %v628, %v652
  %v715 = vmax.f32 %v633, %v657
  %v716 = vmax.f32 %v636, %v660
  %v717 = vmax.f32 %v665, %v689
  %v718 = vmax.f32 %v668, %v692
  %v719 = vmax.f32 %v673, %v697
  %v720 = vmax.f32 %v676, %v700
  %v721 = vmax.f32 %v681, %v705
  %v722 = vmax.f32 %v684, %v708
  %v723 = vmax.f32 %v711, %v717
  %v724 = vmax.f32 %v712, %v718
  %v725 = vmax.f32 %v713, %v719
  %v726 = vmax.f32 %v714, %v720
  %v727 = vmax.f32 %v715, %v721
  %v728 = vmax.f32 %v716, %v722
  %v729 = vld [vmem:[%s2] sm:$0x1]
  %v731 = vlaneseq
  %v732 = vshrl.u32 %v731, 7
  %v733 = vsub.s32 0, %v732
  %v734 = vrot.slane %v729, %v733
  %v736 = vadd.f32 %v723, %v734
  %v737 = vadd.f32 %v724, %v734
  %v738 = vadd.f32 %v725, %v734
  %v739 = vadd.f32 %v726, %v734
  %v740 = vadd.f32 %v727, %v734
  %v741 = vadd.f32 %v728, %v734
  %v742 = vmax.f32 %v736, 0.0
  %v743 = vmax.f32 %v737, 0.0
  %v744 = vmax.f32 %v738, 0.0
  %v745 = vmax.f32 %v739, 0.0
  %v746 = vmax.f32 %v740, 0.0
  %v747 = vmax.f32 %v741, 0.0
  %v748 = vld [vmem:[%s3] sm:$0x1]
  %v750 = vlaneseq
  %v751 = vshrl.u32 %v750, 7
  %v752 = vsub.s32 0, %v751
  %v753 = vrot.slane %v748, %v752
  %v755 = vmul.f32 %v742, %v753
  %v756 = vmul.f32 %v743, %v753
  %v757 = vmul.f32 %v744, %v753
  %v758 = vmul.f32 %v745, %v753
  %v759 = vmul.f32 %v746, %v753
  %v760 = vmul.f32 %v747, %v753
  %v761 = vld [vmem:[%s4] sm:$0x1]
  %v763 = vlaneseq
  %v764 = vshrl.u32 %v763, 7
  %v765 = vsub.s32 0, %v764
  %v766 = vrot.slane %v761, %v765
  %v768 = vadd.f32 %v755, %v766
  %v769 = vadd.f32 %v756, %v766
  %v770 = vadd.f32 %v757, %v766
  %v771 = vadd.f32 %v758, %v766
  %v772 = vadd.f32 %v759, %v766
  %v773 = vadd.f32 %v760, %v766
  %v774 = vpack.c.bf16 %v769, %v768
  %v775 = vpack.c.bf16 %v771, %v770
  %v776 = vpack.c.bf16 %v773, %v772
  %v780 = vunpack.c.l.b16 %v774
  %v781 = vunpack.c.h.b16 %v774
  %v782 = vunpack.c.l.b16 %v775
  %v783 = vunpack.c.h.b16 %v775
  %v784 = vunpack.c.l.b16 %v776
  %v785 = vunpack.c.h.b16 %v776
  %v786 = vpack.c.b16 %v780, %v780
  %v787 = vpack.c.b16 %v781, %v781
  %v788 = vpack.c.b16 %v782, %v782
  %v789 = vpack.c.b16 %v783, %v783
  %v790 = vpack.c.b16 %v784, %v784
  %v791 = vpack.c.b16 %v785, %v785
  %798 = vst [vmem:[%s5] sm:$0xf] %v786
  %799 = vst [vmem:[%s5 + $0x4] sm:$0xf] %v787
  %800 = vst [vmem:[%s5 + $0x8] sm:$0xf] %v788
  %801 = vst [vmem:[%s5 + $0xc] sm:$0xf] %v789
  %802 = vst [vmem:[%s5 + $0x10] sm:$0xf] %v790
  %803 = vst [vmem:[%s5 + $0x14] sm:$0xf] %v791
  // Predicated region
  $region22: #{eegcnn_forward.4} parent=0 // pred_check
    _
  $region23: #{eegcnn_forward.4} parent=0 // pred_check_branch
    %805 = sbr.rel (0) target = $region25
  $region24: #{eegcnn_forward.4} parent=0 // pred_region
    _
  $region25: #{eegcnn_forward.4} parent=0 // pred_fallthru
    _
  // Predicated region
  $region26: #{eegcnn_forward.4} parent=0 // pred_check
    _
  $region27: #{eegcnn_forward.4} parent=0 // pred_check_branch
    %807 = sbr.rel (0) target = $region29
  $region28: #{eegcnn_forward.4} parent=0 // pred_region
    _
  $region29: #{eegcnn_forward.4} parent=0 // pred_fallthru
    _

// kernel: eegcnn_forward.5
$region0: #{eegcnn_forward.5}
  #allocation0 [shape = 'u32[]', space=smem, size = 0x4, offset = 0x4, fixed_abs, tag = 'smem constant byte address 0x4 - core index']
  #allocation1 [shape = 'u32[144,128]{1,0:T(1,128)}', space=vmem, size = 0x12000, scoped, tag = 'internal scratch']
  %s0 = inlined_call_operand.vmem [shape: bf16[16,640], index: 0, kind: input, shape index: {}]
  %s1 = inlined_call_operand.vmem [shape: bf16[640,128], index: 1, kind: input, shape index: {}]
  %s2 = inlined_call_operand.vmem [shape: f32[1,128], index: 2, kind: input, shape index: {}]
  %s3 = inlined_call_operand.vmem [shape: bf16[128,128], index: 3, kind: input, shape index: {}]
  %s4 = inlined_call_operand.vmem [shape: f32[1,128], index: 4, kind: input, shape index: {}]
  %s5 = inlined_call_operand.vmem [shape: f32[16,128], index: 5, kind: output, shape index: {}]
  %s6 = sld [smem:[#allocation0]]
  $region30: #{eegcnn_forward.5} parent=0
    _
  %s8 = ssub.s32 1, %s6
  %s9 = scalar_select 0, %s8, %s6
  // Predicated region
  $region2: #{eegcnn_forward.5} parent=0 // pred_check
    _
  $region3: #{eegcnn_forward.5} parent=0 // pred_check_branch
    %11 = sbr.rel (0) target = $region5
  $region4: #{eegcnn_forward.5} parent=0 // pred_region
    _
  $region5: #{eegcnn_forward.5} parent=0 // pred_fallthru
    _
  // Predicated region
  $region6: #{eegcnn_forward.5} parent=0 // pred_check
    _
  $region7: #{eegcnn_forward.5} parent=0 // pred_check_branch
    %13 = sbr.rel (0) target = $region9
  $region8: #{eegcnn_forward.5} parent=0 // pred_region
    _
  $region9: #{eegcnn_forward.5} parent=0 // pred_fallthru
    _
  // Predicated region
  $region10: #{eegcnn_forward.5} parent=0 // pred_check
    _
  $region11: #{eegcnn_forward.5} parent=0 // pred_check_branch
    %15 = sbr.rel (0) target = $region13
  $region12: #{eegcnn_forward.5} parent=0 // pred_region
    _
  $region13: #{eegcnn_forward.5} parent=0 // pred_fallthru
    _
  // Predicated region
  $region14: #{eegcnn_forward.5} parent=0 // pred_check
    _
  $region15: #{eegcnn_forward.5} parent=0 // pred_check_branch
    %17 = sbr.rel (0) target = $region17
  $region16: #{eegcnn_forward.5} parent=0 // pred_region
    _
  $region17: #{eegcnn_forward.5} parent=0 // pred_fallthru
    _
  // Predicated region
  $region18: #{eegcnn_forward.5} parent=0 // pred_check
    _
  $region19: #{eegcnn_forward.5} parent=0 // pred_check_branch
    %19 = sbr.rel (0) target = $region21
  $region20: #{eegcnn_forward.5} parent=0 // pred_region
    _
  $region21: #{eegcnn_forward.5} parent=0 // pred_fallthru
    _
  %v21 = vld [vmem:[%s0] sm:$0xff]
  %v22 = vld [vmem:[%s0 + $0x8] sm:$0xff]
  %v23 = vld [vmem:[%s0 + $0x10] sm:$0xf]
  %v24 = vld [vmem:[%s0 + $0x14] sm:$0xff]
  %v25 = vld [vmem:[%s0 + $0x1c] sm:$0xff]
  %v26 = vld [vmem:[%s0 + $0x24] sm:$0xf]
  %v27 = vld [vmem:[%s1] sm:$0xf]
  %v28 = vld [vmem:[%s1 + $0x4] sm:$0xf]
  %v29 = vld [vmem:[%s1 + $0x8] sm:$0xf]
  %v30 = vld [vmem:[%s1 + $0xc] sm:$0xf]
  %v31 = vld [vmem:[%s1 + $0x10] sm:$0xf]
  %v32 = vld [vmem:[%s1 + $0x14] sm:$0xf]
  %v33 = vld [vmem:[%s1 + $0x18] sm:$0xf]
  %v34 = vld [vmem:[%s1 + $0x1c] sm:$0xf]
  %v35 = vld [vmem:[%s1 + $0x20] sm:$0xf]
  %v36 = vld [vmem:[%s1 + $0x24] sm:$0xf]
  %v37 = vld [vmem:[%s1 + $0x28] sm:$0xf]
  %v38 = vld [vmem:[%s1 + $0x2c] sm:$0xf]
  %v39 = vld [vmem:[%s1 + $0x30] sm:$0xf]
  %v40 = vld [vmem:[%s1 + $0x34] sm:$0xf]
  %v41 = vld [vmem:[%s1 + $0x38] sm:$0xf]
  %v42 = vld [vmem:[%s1 + $0x3c] sm:$0xf]
  %v43 = vld [vmem:[%s1 + $0x40] sm:$0xf]
  %v44 = vld [vmem:[%s1 + $0x44] sm:$0xf]
  %v45 = vld [vmem:[%s1 + $0x48] sm:$0xf]
  %v46 = vld [vmem:[%s1 + $0x4c] sm:$0xf]
  %v47 = vld [vmem:[%s1 + $0x50] sm:$0xf]
  %v48 = vld [vmem:[%s1 + $0x54] sm:$0xf]
  %v49 = vld [vmem:[%s1 + $0x58] sm:$0xf]
  %v50 = vld [vmem:[%s1 + $0x5c] sm:$0xf]
  %v51 = vld [vmem:[%s1 + $0x60] sm:$0xf]
  %v52 = vld [vmem:[%s1 + $0x64] sm:$0xf]
  %v53 = vld [vmem:[%s1 + $0x68] sm:$0xf]
  %v54 = vld [vmem:[%s1 + $0x6c] sm:$0xf]
  %v55 = vld [vmem:[%s1 + $0x70] sm:$0xf]
  %v56 = vld [vmem:[%s1 + $0x74] sm:$0xf]
  %v57 = vld [vmem:[%s1 + $0x78] sm:$0xf]
  %v58 = vld [vmem:[%s1 + $0x7c] sm:$0xf]
  %v59 = vld [vmem:[%s1 + $0x80] sm:$0xf]
  %v60 = vld [vmem:[%s1 + $0x84] sm:$0xf]
  %v61 = vld [vmem:[%s1 + $0x88] sm:$0xf]
  %v62 = vld [vmem:[%s1 + $0x8c] sm:$0xf]
  %v63 = vld [vmem:[%s1 + $0x90] sm:$0xf]
  %v64 = vld [vmem:[%s1 + $0x94] sm:$0xf]
  %v65 = vld [vmem:[%s1 + $0x98] sm:$0xf]
  %v66 = vld [vmem:[%s1 + $0x9c] sm:$0xf]
  %v67 = vld [vmem:[%s1 + $0xa0] sm:$0xf]
  %v68 = vld [vmem:[%s1 + $0xa4] sm:$0xf]
  %v69 = vld [vmem:[%s1 + $0xa8] sm:$0xf]
  %v70 = vld [vmem:[%s1 + $0xac] sm:$0xf]
  %v71 = vld [vmem:[%s1 + $0xb0] sm:$0xf]
  %v72 = vld [vmem:[%s1 + $0xb4] sm:$0xf]
  %v73 = vld [vmem:[%s1 + $0xb8] sm:$0xf]
  %v74 = vld [vmem:[%s1 + $0xbc] sm:$0xf]
  %v75 = vld [vmem:[%s1 + $0xc0] sm:$0xf]
  %v76 = vld [vmem:[%s1 + $0xc4] sm:$0xf]
  %v77 = vld [vmem:[%s1 + $0xc8] sm:$0xf]
  %v78 = vld [vmem:[%s1 + $0xcc] sm:$0xf]
  %v79 = vld [vmem:[%s1 + $0xd0] sm:$0xf]
  %v80 = vld [vmem:[%s1 + $0xd4] sm:$0xf]
  %v81 = vld [vmem:[%s1 + $0xd8] sm:$0xf]
  %v82 = vld [vmem:[%s1 + $0xdc] sm:$0xf]
  %v83 = vld [vmem:[%s1 + $0xe0] sm:$0xf]
  %v84 = vld [vmem:[%s1 + $0xe4] sm:$0xf]
  %v85 = vld [vmem:[%s1 + $0xe8] sm:$0xf]
  %v86 = vld [vmem:[%s1 + $0xec] sm:$0xf]
  %v87 = vld [vmem:[%s1 + $0xf0] sm:$0xf]
  %v88 = vld [vmem:[%s1 + $0xf4] sm:$0xf]
  %v89 = vld [vmem:[%s1 + $0xf8] sm:$0xf]
  %v90 = vld [vmem:[%s1 + $0xfc] sm:$0xf]
  %v91 = vld [vmem:[%s1 + $0x100] sm:$0xf]
  %v92 = vld [vmem:[%s1 + $0x104] sm:$0xf]
  %v93 = vld [vmem:[%s1 + $0x108] sm:$0xf]
  %v94 = vld [vmem:[%s1 + $0x10c] sm:$0xf]
  %v95 = vld [vmem:[%s1 + $0x110] sm:$0xf]
  %v96 = vld [vmem:[%s1 + $0x114] sm:$0xf]
  %v97 = vld [vmem:[%s1 + $0x118] sm:$0xf]
  %v98 = vld [vmem:[%s1 + $0x11c] sm:$0xf]
  %v99 = vld [vmem:[%s1 + $0x120] sm:$0xf]
  %v100 = vld [vmem:[%s1 + $0x124] sm:$0xf]
  %v101 = vld [vmem:[%s1 + $0x128] sm:$0xf]
  %v102 = vld [vmem:[%s1 + $0x12c] sm:$0xf]
  %v103 = vld [vmem:[%s1 + $0x130] sm:$0xf]
  %v104 = vld [vmem:[%s1 + $0x134] sm:$0xf]
  %v105 = vld [vmem:[%s1 + $0x138] sm:$0xf]
  %v106 = vld [vmem:[%s1 + $0x13c] sm:$0xf]
  %v107 = vld [vmem:[%s2] sm:$0x1]
  %v109 = vlaneseq
  %v110 = vshrl.u32 %v109, 7
  %v111 = vsub.s32 0, %v110
  %v112 = vrot.slane %v107, %v111
  %v120 = vunpack.c.l.b16 %v21
  %v121 = vunpack.c.h.b16 %v21
  %v122 = vunpack.c.l.b16 %v22
  %v123 = vunpack.c.h.b16 %v22
  %v124 = vunpack.c.l.b16 %v23
  %v125 = vunpack.c.l.b16 %v24
  %v126 = vunpack.c.h.b16 %v24
  %v127 = vunpack.c.l.b16 %v25
  %v128 = vunpack.c.h.b16 %v25
  %v129 = vunpack.c.l.b16 %v26
  %v130 = vpack.c.b16 %v125, %v120
  %v131 = vpack.c.b16 %v126, %v121
  %v132 = vpack.c.b16 %v127, %v122
  %v133 = vpack.c.b16 %v128, %v123
  %v134 = vpack.c.b16 %v129, %v124
  %v220 = vunpack.c.l.b16 %v27
  %v221 = vunpack.c.l.b16 %v28
  %v222 = vunpack.c.l.b16 %v29
  %v223 = vunpack.c.l.b16 %v30
  %v224 = vunpack.c.l.b16 %v31
  %v225 = vunpack.c.l.b16 %v32
  %v226 = vunpack.c.l.b16 %v33
  %v227 = vunpack.c.l.b16 %v34
  %v228 = vunpack.c.l.b16 %v35
  %v229 = vunpack.c.l.b16 %v36
  %v230 = vunpack.c.l.b16 %v37
  %v231 = vunpack.c.l.b16 %v38
  %v232 = vunpack.c.l.b16 %v39
  %v233 = vunpack.c.l.b16 %v40
  %v234 = vunpack.c.l.b16 %v41
  %v235 = vunpack.c.l.b16 %v42
  %v236 = vunpack.c.l.b16 %v43
  %v237 = vunpack.c.l.b16 %v44
  %v238 = vunpack.c.l.b16 %v45
  %v239 = vunpack.c.l.b16 %v46
  %v240 = vunpack.c.l.b16 %v47
  %v241 = vunpack.c.l.b16 %v48
  %v242 = vunpack.c.l.b16 %v49
  %v243 = vunpack.c.l.b16 %v50
  %v244 = vunpack.c.l.b16 %v51
  %v245 = vunpack.c.l.b16 %v52
  %v246 = vunpack.c.l.b16 %v53
  %v247 = vunpack.c.l.b16 %v54
  %v248 = vunpack.c.l.b16 %v55
  %v249 = vunpack.c.l.b16 %v56
  %v250 = vunpack.c.l.b16 %v57
  %v251 = vunpack.c.l.b16 %v58
  %v252 = vunpack.c.l.b16 %v59
  %v253 = vunpack.c.l.b16 %v60
  %v254 = vunpack.c.l.b16 %v61
  %v255 = vunpack.c.l.b16 %v62
  %v256 = vunpack.c.l.b16 %v63
  %v257 = vunpack.c.l.b16 %v64
  %v258 = vunpack.c.l.b16 %v65
  %v259 = vunpack.c.l.b16 %v66
  %v260 = vunpack.c.l.b16 %v67
  %v261 = vunpack.c.l.b16 %v68
  %v262 = vunpack.c.l.b16 %v69
  %v263 = vunpack.c.l.b16 %v70
  %v264 = vunpack.c.l.b16 %v71
  %v265 = vunpack.c.l.b16 %v72
  %v266 = vunpack.c.l.b16 %v73
  %v267 = vunpack.c.l.b16 %v74
  %v268 = vunpack.c.l.b16 %v75
  %v269 = vunpack.c.l.b16 %v76
  %v270 = vunpack.c.l.b16 %v77
  %v271 = vunpack.c.l.b16 %v78
  %v272 = vunpack.c.l.b16 %v79
  %v273 = vunpack.c.l.b16 %v80
  %v274 = vunpack.c.l.b16 %v81
  %v275 = vunpack.c.l.b16 %v82
  %v276 = vunpack.c.l.b16 %v83
  %v277 = vunpack.c.l.b16 %v84
  %v278 = vunpack.c.l.b16 %v85
  %v279 = vunpack.c.l.b16 %v86
  %v280 = vunpack.c.l.b16 %v87
  %v281 = vunpack.c.l.b16 %v88
  %v282 = vunpack.c.l.b16 %v89
  %v283 = vunpack.c.l.b16 %v90
  %v284 = vunpack.c.l.b16 %v91
  %v285 = vunpack.c.l.b16 %v92
  %v286 = vunpack.c.l.b16 %v93
  %v287 = vunpack.c.l.b16 %v94
  %v288 = vunpack.c.l.b16 %v95
  %v289 = vunpack.c.l.b16 %v96
  %v290 = vunpack.c.l.b16 %v97
  %v291 = vunpack.c.l.b16 %v98
  %v292 = vunpack.c.l.b16 %v99
  %v293 = vunpack.c.l.b16 %v100
  %v294 = vunpack.c.l.b16 %v101
  %v295 = vunpack.c.l.b16 %v102
  %v296 = vunpack.c.l.b16 %v103
  %v297 = vunpack.c.l.b16 %v104
  %v298 = vunpack.c.l.b16 %v105
  %v299 = vunpack.c.l.b16 %v106
  %v300 = vpack.c.b16 %v221, %v220
  %v301 = vpack.c.b16 %v223, %v222
  %v302 = vpack.c.b16 %v225, %v224
  %v303 = vpack.c.b16 %v227, %v226
  %v304 = vpack.c.b16 %v229, %v228
  %v305 = vpack.c.b16 %v231, %v230
  %v306 = vpack.c.b16 %v233, %v232
  %v307 = vpack.c.b16 %v235, %v234
  %v308 = vpack.c.b16 %v237, %v236
  %v309 = vpack.c.b16 %v239, %v238
  %v310 = vpack.c.b16 %v241, %v240
  %v311 = vpack.c.b16 %v243, %v242
  %v312 = vpack.c.b16 %v245, %v244
  %v313 = vpack.c.b16 %v247, %v246
  %v314 = vpack.c.b16 %v249, %v248
  %v315 = vpack.c.b16 %v251, %v250
  %v316 = vpack.c.b16 %v253, %v252
  %v317 = vpack.c.b16 %v255, %v254
  %v318 = vpack.c.b16 %v257, %v256
  %v319 = vpack.c.b16 %v259, %v258
  %v320 = vpack.c.b16 %v261, %v260
  %v321 = vpack.c.b16 %v263, %v262
  %v322 = vpack.c.b16 %v265, %v264
  %v323 = vpack.c.b16 %v267, %v266
  %v324 = vpack.c.b16 %v269, %v268
  %v325 = vpack.c.b16 %v271, %v270
  %v326 = vpack.c.b16 %v273, %v272
  %v327 = vpack.c.b16 %v275, %v274
  %v328 = vpack.c.b16 %v277, %v276
  %v329 = vpack.c.b16 %v279, %v278
  %v330 = vpack.c.b16 %v281, %v280
  %v331 = vpack.c.b16 %v283, %v282
  %v332 = vpack.c.b16 %v285, %v284
  %v333 = vpack.c.b16 %v287, %v286
  %v334 = vpack.c.b16 %v289, %v288
  %v335 = vpack.c.b16 %v291, %v290
  %v336 = vpack.c.b16 %v293, %v292
  %v337 = vpack.c.b16 %v295, %v294
  %v338 = vpack.c.b16 %v297, %v296
  %v339 = vpack.c.b16 %v299, %v298
  %380 = vmatprep.subr.bf16.mxu0 0
  %381 = vmatpush1.bf16.msra.mxu0 %v307
  %382 = vmatprep.subr.bf16.mxu0 0
  %383 = vmatpush1.bf16.msra.mxu0 %v306
  %384 = vmatprep.subr.bf16.mxu0 0
  %385 = vmatpush1.bf16.msra.mxu0 %v305
  %386 = vmatprep.subr.bf16.mxu0 0
  %387 = vmatpush1.bf16.msra.mxu0 %v304
  %388 = vmatprep.subr.bf16.mxu0 0
  %389 = vmatpush1.bf16.msra.mxu0 %v303
  %390 = vmatprep.subr.bf16.mxu0 0
  %391 = vmatpush1.bf16.msra.mxu0 %v302
  %392 = vmatprep.subr.bf16.mxu0 0
  %393 = vmatpush1.bf16.msra.mxu0 %v301
  %394 = vmatprep.subr.bf16.mxu0 0
  %395 = vmatpush1.bf16.msra.mxu0 %v300
  %396 = vmatprep.subr.bf16.mxu0 0
  %397 = vmatpush2.bf16.msra.mxu0 %v315
  %398 = vmatprep.subr.bf16.mxu0 0
  %399 = vmatpush2.bf16.msra.mxu0 %v314
  %400 = vmatprep.subr.bf16.mxu0 0
  %401 = vmatpush2.bf16.msra.mxu0 %v313
  %402 = vmatprep.subr.bf16.mxu0 0
  %403 = vmatpush2.bf16.msra.mxu0 %v312
  %404 = vmatprep.subr.bf16.mxu0 0
  %405 = vmatpush2.bf16.msra.mxu0 %v311
  %406 = vmatprep.subr.bf16.mxu0 0
  %407 = vmatpush2.bf16.msra.mxu0 %v310
  %408 = vmatprep.subr.bf16.mxu0 0
  %409 = vmatpush2.bf16.msra.mxu0 %v309
  %410 = vmatprep.subr.bf16.mxu0 0
  %411 = vmatpush2.bf16.msra.mxu0 %v308
  %412 = vmatprep.mubr.bf16.mxu0 %v131
  %413 = vmatmul.mubr.bf16.gmra.mxu0 %v130
  %v414 = vpop.f32.mrf.mxu0
  %v415 = vadd.f32 %v112, %v414
  %v416 = vpop.f32.mrf.mxu0
  %v417 = vpop.f32.mrf.mxu0
  %v418 = vadd.f32 %v112, %v417
  %v419 = vpop.f32.mrf.mxu0
  %420 = vdwg.mxu0
  %421 = vmatprep.subr.bf16.mxu0 0
  %422 = vmatpush1.bf16.msra.mxu0 %v323
  %423 = vmatprep.subr.bf16.mxu0 0
  %424 = vmatpush1.bf16.msra.mxu0 %v322
  %425 = vmatprep.subr.bf16.mxu0 0
  %426 = vmatpush1.bf16.msra.mxu0 %v321
  %427 = vmatprep.subr.bf16.mxu0 0
  %428 = vmatpush1.bf16.msra.mxu0 %v320
  %429 = vmatprep.subr.bf16.mxu0 0
  %430 = vmatpush1.bf16.msra.mxu0 %v319
  %431 = vmatprep.subr.bf16.mxu0 0
  %432 = vmatpush1.bf16.msra.mxu0 %v318
  %433 = vmatprep.subr.bf16.mxu0 0
  %434 = vmatpush1.bf16.msra.mxu0 %v317
  %435 = vmatprep.subr.bf16.mxu0 0
  %436 = vmatpush1.bf16.msra.mxu0 %v316
  %437 = vmatprep.subr.bf16.mxu0 0
  %438 = vmatpush2.bf16.msra.mxu0 %v331
  %439 = vmatprep.subr.bf16.mxu0 0
  %440 = vmatpush2.bf16.msra.mxu0 %v330
  %441 = vmatprep.subr.bf16.mxu0 0
  %442 = vmatpush2.bf16.msra.mxu0 %v329
  %443 = vmatprep.subr.bf16.mxu0 0
  %444 = vmatpush2.bf16.msra.mxu0 %v328
  %445 = vmatprep.subr.bf16.mxu0 0
  %446 = vmatpush2.bf16.msra.mxu0 %v327
  %447 = vmatprep.subr.bf16.mxu0 0
  %448 = vmatpush2.bf16.msra.mxu0 %v326
  %449 = vmatprep.subr.bf16.mxu0 0
  %450 = vmatpush2.bf16.msra.mxu0 %v325
  %451 = vmatprep.subr.bf16.mxu0 0
  %452 = vmatpush2.bf16.msra.mxu0 %v324
  %453 = vmatprep.mubr.bf16.mxu0 %v133
  %454 = vmatmul.mubr.bf16.gmra.mxu0 %v132
  %v455 = vpop.f32.mrf.mxu0
  %v456 = vadd.f32 %v415, %v455
  %v457 = vpop.f32.mrf.mxu0
  %v458 = vpop.f32.mrf.mxu0
  %v459 = vadd.f32 %v418, %v458
  %v460 = vpop.f32.mrf.mxu0
  %461 = vdwg.mxu0
  %462 = vmatprep.subr.bf16.mxu0 0
  %463 = vmatpush1.bf16.msra.mxu0 %v339
  %464 = vmatprep.subr.bf16.mxu0 0
  %465 = vmatpush1.bf16.msra.mxu0 %v338
  %466 = vmatprep.subr.bf16.mxu0 0
  %467 = vmatpush1.bf16.msra.mxu0 %v337
  %468 = vmatprep.subr.bf16.mxu0 0
  %469 = vmatpush1.bf16.msra.mxu0 %v336
  %470 = vmatprep.subr.bf16.mxu0 0
  %471 = vmatpush1.bf16.msra.mxu0 %v335
  %472 = vmatprep.subr.bf16.mxu0 0
  %473 = vmatpush1.bf16.msra.mxu0 %v334
  %474 = vmatprep.subr.bf16.mxu0 0
  %475 = vmatpush1.bf16.msra.mxu0 %v333
  %476 = vmatprep.subr.bf16.mxu0 0
  %477 = vmatpush1.bf16.msra.mxu0 %v332
  %478 = vmatprep.subr.bf16.mxu0 0
  %479 = vmatpush2.bf16.msra.mxu0 0
  %480 = vmatprep.subr.bf16.mxu0 0
  %481 = vmatpush2.bf16.msra.mxu0 0
  %482 = vmatprep.subr.bf16.mxu0 0
  %483 = vmatpush2.bf16.msra.mxu0 0
  %484 = vmatprep.subr.bf16.mxu0 0
  %485 = vmatpush2.bf16.msra.mxu0 0
  %486 = vmatprep.subr.bf16.mxu0 0
  %487 = vmatpush2.bf16.msra.mxu0 0
  %488 = vmatprep.subr.bf16.mxu0 0
  %489 = vmatpush2.bf16.msra.mxu0 0
  %490 = vmatprep.subr.bf16.mxu0 0
  %491 = vmatpush2.bf16.msra.mxu0 0
  %492 = vmatprep.subr.bf16.mxu0 0
  %493 = vmatpush2.bf16.msra.mxu0 0
  %494 = vmatprep.mubr.bf16.mxu0 0
  %495 = vmatmul.mubr.bf16.gmra.mxu0 %v134
  %v496 = vpop.f32.mrf.mxu0
  %v497 = vadd.f32 %v456, %v496
  %v498 = vpop.f32.mrf.mxu0
  %v499 = vpop.f32.mrf.mxu0
  %v500 = vadd.f32 %v459, %v499
  %v501 = vpop.f32.mrf.mxu0
  %502 = vdwg.mxu0
  %v503 = vmax.f32 %v497, 0.0
  %v504 = vmax.f32 %v500, 0.0
  %v505 = vpack.c.bf16 %v504, %v503
  %v506 = vld [vmem:[%s3] sm:$0xf]
  %v507 = vld [vmem:[%s3 + $0x4] sm:$0xf]
  %v508 = vld [vmem:[%s3 + $0x8] sm:$0xf]
  %v509 = vld [vmem:[%s3 + $0xc] sm:$0xf]
  %v510 = vld [vmem:[%s3 + $0x10] sm:$0xf]
  %v511 = vld [vmem:[%s3 + $0x14] sm:$0xf]
  %v512 = vld [vmem:[%s3 + $0x18] sm:$0xf]
  %v513 = vld [vmem:[%s3 + $0x1c] sm:$0xf]
  %v514 = vld [vmem:[%s3 + $0x20] sm:$0xf]
  %v515 = vld [vmem:[%s3 + $0x24] sm:$0xf]
  %v516 = vld [vmem:[%s3 + $0x28] sm:$0xf]
  %v517 = vld [vmem:[%s3 + $0x2c] sm:$0xf]
  %v518 = vld [vmem:[%s3 + $0x30] sm:$0xf]
  %v519 = vld [vmem:[%s3 + $0x34] sm:$0xf]
  %v520 = vld [vmem:[%s3 + $0x38] sm:$0xf]
  %v521 = vld [vmem:[%s3 + $0x3c] sm:$0xf]
  %v522 = vld [vmem:[%s4] sm:$0x1]
  %v524 = vlaneseq
  %v525 = vshrl.u32 %v524, 7
  %v526 = vsub.s32 0, %v525
  %v527 = vrot.slane %v522, %v526
  %v545 = vunpack.c.l.b16 %v506
  %v546 = vunpack.c.l.b16 %v507
  %v547 = vunpack.c.l.b16 %v508
  %v548 = vunpack.c.l.b16 %v509
  %v549 = vunpack.c.l.b16 %v510
  %v550 = vunpack.c.l.b16 %v511
  %v551 = vunpack.c.l.b16 %v512
  %v552 = vunpack.c.l.b16 %v513
  %v553 = vunpack.c.l.b16 %v514
  %v554 = vunpack.c.l.b16 %v515
  %v555 = vunpack.c.l.b16 %v516
  %v556 = vunpack.c.l.b16 %v517
  %v557 = vunpack.c.l.b16 %v518
  %v558 = vunpack.c.l.b16 %v519
  %v559 = vunpack.c.l.b16 %v520
  %v560 = vunpack.c.l.b16 %v521
  %v561 = vpack.c.b16 %v546, %v545
  %v562 = vpack.c.b16 %v548, %v547
  %v563 = vpack.c.b16 %v550, %v549
  %v564 = vpack.c.b16 %v552, %v551
  %v565 = vpack.c.b16 %v554, %v553
  %v566 = vpack.c.b16 %v556, %v555
  %v567 = vpack.c.b16 %v558, %v557
  %v568 = vpack.c.b16 %v560, %v559
  %577 = vmatprep.subr.bf16.mxu0 0
  %578 = vmatpush1.bf16.msra.mxu0 %v568
  %579 = vmatprep.subr.bf16.mxu0 0
  %580 = vmatpush1.bf16.msra.mxu0 %v567
  %581 = vmatprep.subr.bf16.mxu0 0
  %582 = vmatpush1.bf16.msra.mxu0 %v566
  %583 = vmatprep.subr.bf16.mxu0 0
  %584 = vmatpush1.bf16.msra.mxu0 %v565
  %585 = vmatprep.subr.bf16.mxu0 0
  %586 = vmatpush1.bf16.msra.mxu0 %v564
  %587 = vmatprep.subr.bf16.mxu0 0
  %588 = vmatpush1.bf16.msra.mxu0 %v563
  %589 = vmatprep.subr.bf16.mxu0 0
  %590 = vmatpush1.bf16.msra.mxu0 %v562
  %591 = vmatprep.subr.bf16.mxu0 0
  %592 = vmatpush1.bf16.msra.mxu0 %v561
  %593 = vmatprep.subr.bf16.mxu0 0
  %594 = vmatpush2.bf16.msra.mxu0 0
  %595 = vmatprep.subr.bf16.mxu0 0
  %596 = vmatpush2.bf16.msra.mxu0 0
  %597 = vmatprep.subr.bf16.mxu0 0
  %598 = vmatpush2.bf16.msra.mxu0 0
  %599 = vmatprep.subr.bf16.mxu0 0
  %600 = vmatpush2.bf16.msra.mxu0 0
  %601 = vmatprep.subr.bf16.mxu0 0
  %602 = vmatpush2.bf16.msra.mxu0 0
  %603 = vmatprep.subr.bf16.mxu0 0
  %604 = vmatpush2.bf16.msra.mxu0 0
  %605 = vmatprep.subr.bf16.mxu0 0
  %606 = vmatpush2.bf16.msra.mxu0 0
  %607 = vmatprep.subr.bf16.mxu0 0
  %608 = vmatpush2.bf16.msra.mxu0 0
  %609 = vmatprep.mubr.bf16.mxu0 0
  %610 = vmatmul.mubr.bf16.gmra.mxu0 %v505
  %v611 = vpop.f32.mrf.mxu0
  %v612 = vadd.f32 %v527, %v611
  %v613 = vpop.f32.mrf.mxu0
  %v614 = vpop.f32.mrf.mxu0
  %v615 = vadd.f32 %v527, %v614
  %v616 = vpop.f32.mrf.mxu0
  %617 = vdwg.mxu0
  %618 = vst [vmem:[%s5] sm:$0xff] %v612
  %619 = vst [vmem:[%s5 + $0x8] sm:$0xff] %v615
  // Predicated region
  $region22: #{eegcnn_forward.5} parent=0 // pred_check
    _
  $region23: #{eegcnn_forward.5} parent=0 // pred_check_branch
    %621 = sbr.rel (0) target = $region25
  $region24: #{eegcnn_forward.5} parent=0 // pred_region
    _
  $region25: #{eegcnn_forward.5} parent=0 // pred_fallthru
    _
  // Predicated region
  $region26: #{eegcnn_forward.5} parent=0 // pred_check
    _
  $region27: #{eegcnn_forward.5} parent=0 // pred_check_branch
    %623 = sbr.rel (0) target = $region29
  $region28: #{eegcnn_forward.5} parent=0 // pred_region
    _
  $region29: #{eegcnn_forward.5} parent=0 // pred_fallthru
    _

</llo_original>
